<compile_context>
chip_gen: v6e
topology: v6e:2x2x1
jax: 0.10.0
libtpu: 0.0.40
codegen_flags: <defaults>
</compile_context>

<pallas_src>
import math

import jax
import jax.numpy as jnp
from jax.experimental import pallas as pl
from jax.experimental.pallas import tpu as pltpu

NEG_INF = 1e12   # stand-in for constant.INFINITY_NUMBER in the reference code
PAD_NEG = 1e30   # only for padded source positions (guarantees exp -> 0 exactly)


def _round_up(x, m):
    return (x + m - 1) // m * m


def _choose_batch_tile(B, L8, D, vmem_budget_bytes=8 << 20):
    """Pick a batch tile so the double-buffered ctx stream fits comfortably in
    scoped VMEM (budget chosen with v7x's 64 MiB physical / 32 MiB scoped in mind)."""
    if B <= 8:
        return B
    per_row = 2 * L8 * D * 4          # double-buffered f32 ctx block (dominant stream)
    tb = (vmem_budget_bytes // max(per_row, 1)) // 8 * 8
    tb = int(max(8, min(tb, 512)))
    return min(tb, _round_up(B, 8))


def coverage_attention_kernel(inp_ref, ctx_ref, cov_ref, bias_ref,
                              w_in_t_ref, w_c_t_ref, b_c_ref,
                              w_cov_ref, v_ref,
                              w_out_wc_ref, w_out_x_ref,
                              h_ref, wc_ref, attn_ref):
    TB, L8, D = ctx_ref.shape
    Lp = attn_ref.shape[-1]

    x = inp_ref[...]                      # (TB, D)       f32
    ctx = ctx_ref[...]                    # (TB, L8, D)
    coverage = cov_ref[...]               # (TB, L8)
    bias = bias_ref[...]                  # (TB, L8) additive mask (0 or -1e12 / -1e30)

    # target = linear_in(input)                                   (TB, D)    [MXU]
    target = jnp.dot(x, w_in_t_ref[...], preferred_element_type=jnp.float32)

    # source = linear_c(context)  -- one flattened matmul          (TB,L8,D)  [MXU]
    src = jnp.dot(ctx.reshape(TB * L8, D), w_c_t_ref[...],
                  preferred_element_type=jnp.float32)
    src = src.reshape(TB, L8, D) + b_c_ref[...].reshape(1, 1, D)

    # cov = linear_cov(coverage.unsqueeze(2)) == outer product     (VPU)
    cov_term = coverage[:, :, None] * w_cov_ref[...].reshape(1, 1, D)

    # e = tanh(target + source + cov)                              (EUP)
    e = jnp.tanh(target[:, None, :] + src + cov_term)

    # scores = linear_v(e): broadcast-mul + lane reduce (VPU + XLU), additive mask
    logits = jnp.sum(e * v_ref[...].reshape(1, 1, D), axis=-1) + bias      # (TB, L8)

    # softmax over source positions; normalisation fused into the weighted sum
    m = jnp.max(logits, axis=-1, keepdims=True)
    p = jnp.exp(logits - m)
    inv = pl.reciprocal(jnp.sum(p, axis=-1, keepdims=True), approx=False)
    attn = p * inv                                                          # (TB, L8)

    # weighted_context = attn @ context: broadcast-mul + sublane reduce (VPU + XLU)
    weighted = jnp.sum(p[:, :, None] * ctx, axis=1) * inv                   # (TB, D)

    # h_tilde = tanh(linear_out(cat(weighted, input))) -- concat split into 2 matmuls
    h = jnp.tanh(
        jnp.dot(weighted, w_out_wc_ref[...], preferred_element_type=jnp.float32)
        + jnp.dot(x, w_out_x_ref[...], preferred_element_type=jnp.float32))

    h_ref[...] = h.astype(h_ref.dtype)
    wc_ref[...] = weighted.astype(wc_ref.dtype)

    # lane-dense attention store: pad L8 -> Lp (multiple of 128); wrapper slices back
    if Lp > L8:
        attn = jnp.concatenate(
            [attn, jnp.zeros((TB, Lp - L8), dtype=attn.dtype)], axis=-1)
    attn_ref[...] = attn.astype(attn_ref.dtype)


def prepare_params(w_in, w_c, b_c, w_v, w_cov, w_out):
    """Pre-transpose / reshape the nn.Linear weights ONCE, outside the call path."""
    D = w_in.shape[0]
    w_out = jnp.asarray(w_out)
    return dict(
        w_in_t=jnp.asarray(w_in).T,              # (D, D)   = W_in^T
        w_c_t=jnp.asarray(w_c).T,                # (D, D)   = W_c^T
        b_c_row=jnp.asarray(b_c).reshape(1, D),  # (1, D)
        w_cov_row=jnp.asarray(w_cov).reshape(1, D),  # linear_cov weight (D,1) -> row
        v_row=jnp.asarray(w_v).reshape(1, D),        # linear_v weight (1,D)
        w_out_wc_t=w_out[:, :D].T,               # (D, D) half acting on weighted_context
        w_out_x_t=w_out[:, D:].T,                # (D, D) half acting on input
    )


def coverage_attention(inp, ctx, coverage, params, mask=None,
                       block_b=None, attn_only=False):
    """inp: (B, D), ctx: (B, L, D), coverage: (B, L), mask: (B, L) (1 = masked) or None."""
    inp = jnp.asarray(inp, jnp.float32)
    ctx = jnp.asarray(ctx, jnp.float32)
    coverage = jnp.asarray(coverage, jnp.float32)
    B, D = inp.shape
    _, L, _ = ctx.shape

    # additive mask bias: one VPU add in the kernel instead of int cmp + select
    if mask is None:
        bias = jnp.zeros((B, L), jnp.float32)
    else:
        bias = jnp.where(jnp.asarray(mask) != 0, -NEG_INF, 0.0).astype(jnp.float32)

    # pad source length to a sublane multiple; padded positions are hard-masked
    L8 = _round_up(L, 8)
    if L8 > L:
        ctx = jnp.pad(ctx, ((0, 0), (0, L8 - L), (0, 0)))
        coverage = jnp.pad(coverage, ((0, 0), (0, L8 - L)))
        bias = jnp.pad(bias, ((0, 0), (0, L8 - L)), constant_values=-PAD_NEG)

    # batch tiling (double-buffered ctx pipeline + megacore-parallel grid axis)
    TB = block_b if block_b is not None else _choose_batch_tile(B, L8, D)
    Bp = _round_up(B, TB)
    if Bp > B:
        pad_b = Bp - B
        inp = jnp.pad(inp, ((0, pad_b), (0, 0)))
        ctx = jnp.pad(ctx, ((0, pad_b), (0, 0), (0, 0)))
        coverage = jnp.pad(coverage, ((0, pad_b), (0, 0)))
        bias = jnp.pad(bias, ((0, pad_b), (0, 0)))

    Lp = _round_up(L8, 128)   # lane-dense attn output slab

    out_shapes = (
        jax.ShapeDtypeStruct((Bp, D), inp.dtype),    # h_tilde
        jax.ShapeDtypeStruct((Bp, D), inp.dtype),    # weighted_context
        jax.ShapeDtypeStruct((Bp, Lp), inp.dtype),   # attn (padded lanes)
    )
    grid_spec = pltpu.PrefetchScalarGridSpec(
        num_scalar_prefetch=0,
        grid=(Bp // TB,),
        in_specs=[
            pl.BlockSpec((TB, D), lambda b: (b, 0)),          # input
            pl.BlockSpec((TB, L8, D), lambda b: (b, 0, 0)),   # context (dominant stream)
            pl.BlockSpec((TB, L8), lambda b: (b, 0)),         # coverage
            pl.BlockSpec((TB, L8), lambda b: (b, 0)),         # additive mask bias
            pl.BlockSpec((D, D), lambda b: (0, 0)),           # W_in^T   (resident)
            pl.BlockSpec((D, D), lambda b: (0, 0)),           # W_c^T    (resident)
            pl.BlockSpec((1, D), lambda b: (0, 0)),           # b_c
            pl.BlockSpec((1, D), lambda b: (0, 0)),           # w_cov row
            pl.BlockSpec((1, D), lambda b: (0, 0)),           # v row
            pl.BlockSpec((D, D), lambda b: (0, 0)),           # W_out (wc half)^T
            pl.BlockSpec((D, D), lambda b: (0, 0)),           # W_out (x half)^T
        ],
        out_specs=[
            pl.BlockSpec((TB, D), lambda b: (b, 0)),
            pl.BlockSpec((TB, D), lambda b: (b, 0)),
            pl.BlockSpec((TB, Lp), lambda b: (b, 0)),
        ],
    )
    h, wc, attn = pl.pallas_call(
        coverage_attention_kernel,
        out_shape=out_shapes,
        grid_spec=grid_spec,
        compiler_params=pltpu.CompilerParams(
            dimension_semantics=("parallel",),          # batch sharding across TCs (v7x)
            vmem_limit_bytes=32 * 1024 * 1024),
    )(inp, ctx, coverage, bias,
      params["w_in_t"], params["w_c_t"], params["b_c_row"],
      params["w_cov_row"], params["v_row"],
      params["w_out_wc_t"], params["w_out_x_t"])

    attn = attn[:B, :L]
    if attn_only:
        return attn
    return h[:B], wc[:B], attn


def _reference(inp, ctx, coverage, w_in, w_c, b_c, w_v, w_cov, w_out, mask=None):
    """Pure-JAX mirror of the PyTorch forward (for correctness check)."""
    hi = jax.lax.Precision.HIGHEST
    target = jnp.dot(inp, w_in.T, precision=hi)                          # (B, D)
    source = jnp.einsum('bld,ed->ble', ctx, w_c, precision=hi) + b_c     # (B, L, D)
    cov = coverage[:, :, None] * w_cov[:, 0][None, None, :]              # (B, L, D)
    e = jnp.tanh(target[:, None, :] + source + cov)
    logits = jnp.einsum('bld,d->bl', e, w_v[0], precision=hi)            # (B, L)
    if mask is not None:
        logits = jnp.where(mask != 0, -NEG_INF, logits)
    attn = jax.nn.softmax(logits, axis=1)
    weighted = jnp.einsum('bl,bld->bd', attn, ctx, precision=hi)
    h_tilde = jnp.tanh(jnp.dot(jnp.concatenate([weighted, inp], axis=1),
                               w_out.T, precision=hi))
    return h_tilde, weighted, attn


if __name__ == "__main__":
    B, L, D = 16, 8, 32
    key = jax.random.PRNGKey(0)
    (k_inp, k_ctx, k_cov, k_win, k_wc, k_bc,
     k_wv, k_wcov, k_wout) = jax.random.split(key, 9)

    inp = jax.random.normal(k_inp, (B, D), dtype=jnp.float32)
    ctx = jax.random.normal(k_ctx, (B, L, D), dtype=jnp.float32)
    coverage = 0.1 * jax.random.normal(k_cov, (B, L), dtype=jnp.float32)

    # torch.nn.Linear default init: U(-1/sqrt(fan_in), 1/sqrt(fan_in)); weight is (out, in)
    bd = 1.0 / math.sqrt(D)
    w_in = jax.random.uniform(k_win, (D, D), jnp.float32, -bd, bd)       # linear_in
    w_c = jax.random.uniform(k_wc, (D, D), jnp.float32, -bd, bd)         # linear_c weight
    b_c = jax.random.uniform(k_bc, (D,), jnp.float32, -bd, bd)           # linear_c bias
    w_v = jax.random.uniform(k_wv, (1, D), jnp.float32, -bd, bd)         # linear_v
    w_cov = jax.random.uniform(k_wcov, (D, 1), jnp.float32, -1.0, 1.0)   # linear_cov (fan_in=1)
    bo = 1.0 / math.sqrt(2 * D)
    w_out = jax.random.uniform(k_wout, (D, 2 * D), jnp.float32, -bo, bo)  # linear_out

    # mask out the last two source positions (like padded tokens)
    mask = jnp.concatenate(
        [jnp.zeros((B, L - 2), jnp.int32), jnp.ones((B, 2), jnp.int32)], axis=1)

    params = prepare_params(w_in, w_c, b_c, w_v, w_cov, w_out)
    h_tilde, weighted, attn = coverage_attention(
        inp, ctx, coverage, params, mask=mask, block_b=8)   # block_b=8 -> grid=(2,)
    jax.block_until_ready((h_tilde, weighted, attn))

    h_ref, w_ref, a_ref = _reference(inp, ctx, coverage, w_in, w_c, b_c,
                                     w_v, w_cov, w_out, mask=mask)
    assert h_tilde.shape == (B, D) and weighted.shape == (B, D) and attn.shape == (B, L)
    assert jnp.allclose(h_tilde, h_ref, atol=1e-4, rtol=1e-4)
    assert jnp.allclose(weighted, w_ref, atol=1e-4, rtol=1e-4)
    assert jnp.allclose(attn, a_ref, atol=1e-4, rtol=1e-4)

    print("KERNEL_OK")
</pallas_src>

<mosaic_0001>
module attributes {stable_mosaic.version = 11 : i64} {
  func.func @coverage_attention_kernel(%arg0: i32, %arg1: memref<8x32xf32, #tpu.memory_space<vmem>>, %arg2: memref<8x8x32xf32, #tpu.memory_space<vmem>>, %arg3: memref<8x8xf32, #tpu.memory_space<vmem>>, %arg4: memref<8x8xf32, #tpu.memory_space<vmem>>, %arg5: memref<32x32xf32, #tpu.memory_space<vmem>>, %arg6: memref<32x32xf32, #tpu.memory_space<vmem>>, %arg7: memref<1x32xf32, #tpu.memory_space<vmem>>, %arg8: memref<1x32xf32, #tpu.memory_space<vmem>>, %arg9: memref<1x32xf32, #tpu.memory_space<vmem>>, %arg10: memref<32x32xf32, #tpu.memory_space<vmem>>, %arg11: memref<32x32xf32, #tpu.memory_space<vmem>>, %arg12: memref<8x32xf32, #tpu.memory_space<vmem>>, %arg13: memref<8x32xf32, #tpu.memory_space<vmem>>, %arg14: memref<8x128xf32, #tpu.memory_space<vmem>>) attributes {dimension_semantics = [#tpu.dimension_semantics<parallel>], iteration_bounds = array<i64: 2>, scalar_prefetch = 0 : i64, scratch_operands = 0 : i64, tpu.core_type = #tpu.core_type<tc>, window_params = [{transform_indices = @transform_0, window_bounds = array<i64: 8, 32>}, {transform_indices = @transform_1, window_bounds = array<i64: 8, 8, 32>}, {transform_indices = @transform_2, window_bounds = array<i64: 8, 8>}, {transform_indices = @transform_3, window_bounds = array<i64: 8, 8>}, {pipeline_mode = #tpu.pipeline_mode<synchronous>, transform_indices = @transform_4, window_bounds = array<i64: 32, 32>}, {pipeline_mode = #tpu.pipeline_mode<synchronous>, transform_indices = @transform_5, window_bounds = array<i64: 32, 32>}, {pipeline_mode = #tpu.pipeline_mode<synchronous>, transform_indices = @transform_6, window_bounds = array<i64: 1, 32>}, {pipeline_mode = #tpu.pipeline_mode<synchronous>, transform_indices = @transform_7, window_bounds = array<i64: 1, 32>}, {pipeline_mode = #tpu.pipeline_mode<synchronous>, transform_indices = @transform_8, window_bounds = array<i64: 1, 32>}, {pipeline_mode = #tpu.pipeline_mode<synchronous>, transform_indices = @transform_9, window_bounds = array<i64: 32, 32>}, {pipeline_mode = #tpu.pipeline_mode<synchronous>, transform_indices = @transform_10, window_bounds = array<i64: 32, 32>}, {transform_indices = @transform_11, window_bounds = array<i64: 8, 32>}, {transform_indices = @transform_12, window_bounds = array<i64: 8, 32>}, {transform_indices = @transform_13, window_bounds = array<i64: 8, 128>}]} {
    %c0 = arith.constant 0 : index
    %c0_0 = arith.constant 0 : index
    %0 = vector.load %arg1[%c0, %c0_0] : memref<8x32xf32, #tpu.memory_space<vmem>>, vector<8x32xf32>
    %c0_1 = arith.constant 0 : index
    %c0_2 = arith.constant 0 : index
    %c0_3 = arith.constant 0 : index
    %1 = vector.load %arg2[%c0_1, %c0_2, %c0_3] : memref<8x8x32xf32, #tpu.memory_space<vmem>>, vector<8x8x32xf32>
    %c0_4 = arith.constant 0 : index
    %c0_5 = arith.constant 0 : index
    %2 = vector.load %arg3[%c0_4, %c0_5] : memref<8x8xf32, #tpu.memory_space<vmem>>, vector<8x8xf32>
    %c0_6 = arith.constant 0 : index
    %c0_7 = arith.constant 0 : index
    %3 = vector.load %arg4[%c0_6, %c0_7] : memref<8x8xf32, #tpu.memory_space<vmem>>, vector<8x8xf32>
    %c0_8 = arith.constant 0 : index
    %c0_9 = arith.constant 0 : index
    %4 = vector.load %arg5[%c0_8, %c0_9] : memref<32x32xf32, #tpu.memory_space<vmem>>, vector<32x32xf32>
    %cst = arith.constant dense<0.000000e+00> : vector<8x32xf32>
    %5 = tpu.matmul %0, %4, %cst {dimension_numbers = #tpu.dot_dimension_numbers<[1], [0], [0], [1], [0, 0, 1, 1], [], []>} : vector<8x32xf32>, vector<32x32xf32>, vector<8x32xf32> -> vector<8x32xf32>
    %6 = vector.shape_cast %1 : vector<8x8x32xf32> to vector<64x32xf32>
    %c0_10 = arith.constant 0 : index
    %c0_11 = arith.constant 0 : index
    %7 = vector.load %arg6[%c0_10, %c0_11] : memref<32x32xf32, #tpu.memory_space<vmem>>, vector<32x32xf32>
    %cst_12 = arith.constant dense<0.000000e+00> : vector<64x32xf32>
    %8 = tpu.matmul %6, %7, %cst_12 {dimension_numbers = #tpu.dot_dimension_numbers<[1], [0], [0], [1], [0, 0, 1, 1], [], []>} : vector<64x32xf32>, vector<32x32xf32>, vector<64x32xf32> -> vector<64x32xf32>
    %9 = vector.shape_cast %8 : vector<64x32xf32> to vector<8x8x32xf32>
    %c0_13 = arith.constant 0 : index
    %c0_14 = arith.constant 0 : index
    %10 = vector.load %arg7[%c0_13, %c0_14] : memref<1x32xf32, #tpu.memory_space<vmem>>, vector<1x32xf32>
    %11 = vector.shape_cast %10 : vector<1x32xf32> to vector<1x1x32xf32>
    %12 = vector.broadcast %11 : vector<1x1x32xf32> to vector<8x8x32xf32>
    %13 = arith.addf %9, %12 : vector<8x8x32xf32>
    %14 = vector.shape_cast %2 : vector<8x8xf32> to vector<8x8x1xf32>
    %c0_15 = arith.constant 0 : index
    %c0_16 = arith.constant 0 : index
    %15 = vector.load %arg8[%c0_15, %c0_16] : memref<1x32xf32, #tpu.memory_space<vmem>>, vector<1x32xf32>
    %16 = vector.shape_cast %15 : vector<1x32xf32> to vector<1x1x32xf32>
    %17 = vector.broadcast %14 : vector<8x8x1xf32> to vector<8x8x32xf32>
    %18 = vector.broadcast %16 : vector<1x1x32xf32> to vector<8x8x32xf32>
    %19 = arith.mulf %17, %18 : vector<8x8x32xf32>
    %20 = vector.shape_cast %5 : vector<8x32xf32> to vector<8x1x32xf32>
    %21 = vector.broadcast %20 : vector<8x1x32xf32> to vector<8x8x32xf32>
    %22 = arith.addf %21, %13 : vector<8x8x32xf32>
    %23 = arith.addf %22, %19 : vector<8x8x32xf32>
    %24 = math.tanh %23 : vector<8x8x32xf32>
    %c0_17 = arith.constant 0 : index
    %c0_18 = arith.constant 0 : index
    %25 = vector.load %arg9[%c0_17, %c0_18] : memref<1x32xf32, #tpu.memory_space<vmem>>, vector<1x32xf32>
    %26 = vector.shape_cast %25 : vector<1x32xf32> to vector<1x1x32xf32>
    %27 = vector.broadcast %26 : vector<1x1x32xf32> to vector<8x8x32xf32>
    %28 = arith.mulf %24, %27 : vector<8x8x32xf32>
    %cst_19 = arith.constant dense<0.000000e+00> : vector<8x8xf32>
    %29 = vector.multi_reduction <add>, %28, %cst_19 [2] : vector<8x8x32xf32> to vector<8x8xf32>
    %30 = arith.addf %29, %3 : vector<8x8xf32>
    %cst_20 = arith.constant dense<0xFF800000> : vector<8xf32>
    %31 = vector.multi_reduction <maximumf>, %30, %cst_20 [1] : vector<8x8xf32> to vector<8xf32>
    %32 = vector.shape_cast %31 : vector<8xf32> to vector<8x1xf32>
    %33 = vector.broadcast %32 : vector<8x1xf32> to vector<8x8xf32>
    %34 = arith.subf %30, %33 : vector<8x8xf32>
    %35 = math.exp %34 : vector<8x8xf32>
    %cst_21 = arith.constant dense<0.000000e+00> : vector<8xf32>
    %36 = vector.multi_reduction <add>, %35, %cst_21 [1] : vector<8x8xf32> to vector<8xf32>
    %37 = vector.shape_cast %36 : vector<8xf32> to vector<8x1xf32>
    %38 = tpu.reciprocal %37 : vector<8x1xf32> -> vector<8x1xf32>
    %39 = vector.broadcast %38 : vector<8x1xf32> to vector<8x8xf32>
    %40 = arith.mulf %35, %39 : vector<8x8xf32>
    %41 = vector.shape_cast %35 : vector<8x8xf32> to vector<8x8x1xf32>
    %42 = vector.broadcast %41 : vector<8x8x1xf32> to vector<8x8x32xf32>
    %43 = arith.mulf %42, %1 : vector<8x8x32xf32>
    %cst_22 = arith.constant dense<0.000000e+00> : vector<8x32xf32>
    %44 = vector.multi_reduction <add>, %43, %cst_22 [1] : vector<8x8x32xf32> to vector<8x32xf32>
    %45 = vector.broadcast %38 : vector<8x1xf32> to vector<8x32xf32>
    %46 = arith.mulf %44, %45 : vector<8x32xf32>
    %c0_23 = arith.constant 0 : index
    %c0_24 = arith.constant 0 : index
    %47 = vector.load %arg10[%c0_23, %c0_24] : memref<32x32xf32, #tpu.memory_space<vmem>>, vector<32x32xf32>
    %cst_25 = arith.constant dense<0.000000e+00> : vector<8x32xf32>
    %48 = tpu.matmul %46, %47, %cst_25 {dimension_numbers = #tpu.dot_dimension_numbers<[1], [0], [0], [1], [0, 0, 1, 1], [], []>} : vector<8x32xf32>, vector<32x32xf32>, vector<8x32xf32> -> vector<8x32xf32>
    %c0_26 = arith.constant 0 : index
    %c0_27 = arith.constant 0 : index
    %49 = vector.load %arg11[%c0_26, %c0_27] : memref<32x32xf32, #tpu.memory_space<vmem>>, vector<32x32xf32>
    %cst_28 = arith.constant dense<0.000000e+00> : vector<8x32xf32>
    %50 = tpu.matmul %0, %49, %cst_28 {dimension_numbers = #tpu.dot_dimension_numbers<[1], [0], [0], [1], [0, 0, 1, 1], [], []>} : vector<8x32xf32>, vector<32x32xf32>, vector<8x32xf32> -> vector<8x32xf32>
    %51 = arith.addf %48, %50 : vector<8x32xf32>
    %52 = math.tanh %51 : vector<8x32xf32>
    %c0_29 = arith.constant 0 : index
    %c0_30 = arith.constant 0 : index
    %53 = vector.load %arg12[%c0_29, %c0_30] : memref<8x32xf32, #tpu.memory_space<vmem>>, vector<8x32xf32>
    tpu.vector_store %arg12[%c0_29, %c0_30], %52 {strides = array<i32>} : memref<8x32xf32, #tpu.memory_space<vmem>>, vector<8x32xf32>,
    %c0_31 = arith.constant 0 : index
    %c0_32 = arith.constant 0 : index
    %54 = vector.load %arg13[%c0_31, %c0_32] : memref<8x32xf32, #tpu.memory_space<vmem>>, vector<8x32xf32>
    tpu.vector_store %arg13[%c0_31, %c0_32], %46 {strides = array<i32>} : memref<8x32xf32, #tpu.memory_space<vmem>>, vector<8x32xf32>,
    %cst_33 = arith.constant 0.000000e+00 : f32
    %55 = vector.broadcast %cst_33 : f32 to vector<8x120xf32>
    %56 = tpu.concatenate %40, %55 in 1 : vector<8x8xf32>, vector<8x120xf32> -> vector<8x128xf32>
    %c0_34 = arith.constant 0 : index
    %c0_35 = arith.constant 0 : index
    %57 = vector.load %arg14[%c0_34, %c0_35] : memref<8x128xf32, #tpu.memory_space<vmem>>, vector<8x128xf32>
    tpu.vector_store %arg14[%c0_34, %c0_35], %56 {strides = array<i32>} : memref<8x128xf32, #tpu.memory_space<vmem>>, vector<8x128xf32>,
    return
  }
  func.func @transform_0(%arg0: i32) -> (i32, i32) {
    %c0_i32 = arith.constant 0 : i32
    %c0_i32_0 = arith.constant 0 : i32
    return %arg0, %c0_i32 : i32, i32
  }
  func.func @transform_1(%arg0: i32) -> (i32, i32, i32) {
    %c0_i32 = arith.constant 0 : i32
    %c0_i32_0 = arith.constant 0 : i32
    %c0_i32_1 = arith.constant 0 : i32
    return %arg0, %c0_i32, %c0_i32_0 : i32, i32, i32
  }
  func.func @transform_2(%arg0: i32) -> (i32, i32) {
    %c0_i32 = arith.constant 0 : i32
    %c0_i32_0 = arith.constant 0 : i32
    return %arg0, %c0_i32 : i32, i32
  }
  func.func @transform_3(%arg0: i32) -> (i32, i32) {
    %c0_i32 = arith.constant 0 : i32
    %c0_i32_0 = arith.constant 0 : i32
    return %arg0, %c0_i32 : i32, i32
  }
  func.func @transform_4(%arg0: i32) -> (i32, i32) {
    %c0_i32 = arith.constant 0 : i32
    %c0_i32_0 = arith.constant 0 : i32
    %c0_i32_1 = arith.constant 0 : i32
    return %c0_i32, %c0_i32_0 : i32, i32
  }
  func.func @transform_5(%arg0: i32) -> (i32, i32) {
    %c0_i32 = arith.constant 0 : i32
    %c0_i32_0 = arith.constant 0 : i32
    %c0_i32_1 = arith.constant 0 : i32
    return %c0_i32, %c0_i32_0 : i32, i32
  }
  func.func @transform_6(%arg0: i32) -> (i32, i32) {
    %c0_i32 = arith.constant 0 : i32
    %c0_i32_0 = arith.constant 0 : i32
    %c0_i32_1 = arith.constant 0 : i32
    return %c0_i32, %c0_i32_0 : i32, i32
  }
  func.func @transform_7(%arg0: i32) -> (i32, i32) {
    %c0_i32 = arith.constant 0 : i32
    %c0_i32_0 = arith.constant 0 : i32
    %c0_i32_1 = arith.constant 0 : i32
    return %c0_i32, %c0_i32_0 : i32, i32
  }
  func.func @transform_8(%arg0: i32) -> (i32, i32) {
    %c0_i32 = arith.constant 0 : i32
    %c0_i32_0 = arith.constant 0 : i32
    %c0_i32_1 = arith.constant 0 : i32
    return %c0_i32, %c0_i32_0 : i32, i32
  }
  func.func @transform_9(%arg0: i32) -> (i32, i32) {
    %c0_i32 = arith.constant 0 : i32
    %c0_i32_0 = arith.constant 0 : i32
    %c0_i32_1 = arith.constant 0 : i32
    return %c0_i32, %c0_i32_0 : i32, i32
  }
  func.func @transform_10(%arg0: i32) -> (i32, i32) {
    %c0_i32 = arith.constant 0 : i32
    %c0_i32_0 = arith.constant 0 : i32
    %c0_i32_1 = arith.constant 0 : i32
    return %c0_i32, %c0_i32_0 : i32, i32
  }
  func.func @transform_11(%arg0: i32) -> (i32, i32) {
    %c0_i32 = arith.constant 0 : i32
    %c0_i32_0 = arith.constant 0 : i32
    return %arg0, %c0_i32 : i32, i32
  }
  func.func @transform_12(%arg0: i32) -> (i32, i32) {
    %c0_i32 = arith.constant 0 : i32
    %c0_i32_0 = arith.constant 0 : i32
    return %arg0, %c0_i32 : i32, i32
  }
  func.func @transform_13(%arg0: i32) -> (i32, i32) {
    %c0_i32 = arith.constant 0 : i32
    %c0_i32_0 = arith.constant 0 : i32
    return %arg0, %c0_i32 : i32, i32
  }
}

</mosaic_0001>

<llo_original>
// kernel: tpu_custom_call.1
$region0: #{tpu_custom_call.1}
  #allocation0 [shape = 'u32[]', space=smem, size = 0x4, offset = 0x4, fixed_abs, tag = 'smem constant byte address 0x4 - core index']
  #allocation1 [shape = 'u32[144,128]{1,0:T(1,128)}', space=vmem, size = 0x12000, scoped, tag = 'internal scratch']
  %s0 = inlined_call_operand.hbm [shape: f32[16,32], index: 0, kind: input, shape index: {}]
  %s1 = inlined_call_operand.hbm [shape: f32[16,8,32], index: 1, kind: input, shape index: {}]
  %s2 = inlined_call_operand.vmem [shape: f32[16,8], index: 2, kind: input, shape index: {}]
  %s3 = inlined_call_operand.vmem [shape: f32[16,8], index: 3, kind: input, shape index: {}]
  %s4 = inlined_call_operand.vmem [shape: f32[32,32], index: 4, kind: input, shape index: {}]
  %s5 = inlined_call_operand.hbm [shape: f32[32,32], index: 5, kind: input, shape index: {}]
  %s6 = inlined_call_operand.hbm [shape: f32[1,32], index: 6, kind: input, shape index: {}]
  %s7 = inlined_call_operand.hbm [shape: f32[1,32], index: 7, kind: input, shape index: {}]
  %s8 = inlined_call_operand.hbm [shape: f32[1,32], index: 8, kind: input, shape index: {}]
  %s9 = inlined_call_operand.vmem [shape: f32[32,32], index: 9, kind: input, shape index: {}]
  %s10 = inlined_call_operand.hbm [shape: f32[32,32], index: 10, kind: input, shape index: {}]
  %s11 = inlined_call_operand.hbm [shape: f32[16,32], index: 11, kind: output, shape index: {0}]
  %s12 = inlined_call_operand.hbm [shape: f32[16,32], index: 12, kind: output, shape index: {1}]
  %s13 = inlined_call_operand.hbm [shape: f32[16,128], index: 13, kind: output, shape index: {2}]
  %14 = xla_tuple %s11, %s12, %s13
  %s15 = sld [smem:[#allocation0]]
  $region121: #{tpu_custom_call.1} parent=0
    _
  %s17 = ssub.s32 1, %s15
  %s18 = scalar_select 0, %s17, %s15
  $region1: #{tpu_custom_call.1} parent=0
    #allocation2 [shape = 'u8[8192]{0}', space=vmem, size = 0x2000, scoped, tag = 'input window, operand 0']
    #allocation3 [shape = 's32[2]{0}', space=sflag, size = 0x8, scoped, tag = 'scoped memory for tpu_custom_call.1']
    #allocation4 [shape = 's32[2]{0}', space=sflag, size = 0x8, scoped, tag = 'scoped memory for tpu_custom_call.1']
    #allocation5 [shape = 'u8[65536]{0}', space=vmem, size = 0x10000, scoped, tag = 'input window, operand 1']
    #allocation6 [shape = 's32[2]{0}', space=sflag, size = 0x8, scoped, tag = 'scoped memory for tpu_custom_call.1']
    #allocation7 [shape = 'u8[16384]{0}', space=vmem, size = 0x4000, scoped, tag = 'input window, operand 5, single buffered']
    #allocation8 [shape = 'u8[512]{0}', space=vmem, size = 0x400, scoped, tag = 'input window, operand 6, single buffered']
    #allocation9 [shape = 's32[1]{0}', space=sflag, size = 0x4, scoped, tag = 'scoped memory for tpu_custom_call.1']
    #allocation10 [shape = 'u8[512]{0}', space=vmem, size = 0x400, scoped, tag = 'input window, operand 7, single buffered']
    #allocation11 [shape = 'u8[512]{0}', space=vmem, size = 0x400, scoped, tag = 'input window, operand 8, single buffered']
    #allocation12 [shape = 's32[1]{0}', space=sflag, size = 0x4, scoped, tag = 'scoped memory for tpu_custom_call.1']
    #allocation13 [shape = 'u8[16384]{0}', space=vmem, size = 0x4000, scoped, tag = 'input window, operand 10, single buffered']
    #allocation14 [shape = 'u8[8192]{0}', space=vmem, size = 0x2000, scoped, tag = 'output window, operand 0']
    #allocation15 [shape = 'u8[8192]{0}', space=vmem, size = 0x2000, scoped, tag = 'output window, operand 1']
    #allocation16 [shape = 's32[2]{0}', space=sflag, size = 0x8, scoped, tag = 'scoped memory for tpu_custom_call.1']
    #allocation17 [shape = 'u8[8192]{0}', space=vmem, size = 0x2000, scoped, tag = 'output window, operand 2']
    %19 = vsyncpa [#allocation3], 0
    %s20 = scalar_lea.sflag [#allocation3], 1
    %21 = vsyncpa %s20, 0
    %22 = vsyncpa [#allocation6], 0
    %s23 = scalar_lea.sflag [#allocation6], 1
    %24 = vsyncpa %s23, 0
    %25 = vsyncpa [#allocation9], 0
    %26 = vsyncpa [#allocation12], 0
    %27 = vsyncpa [#allocation4], 0
    %s28 = scalar_lea.sflag [#allocation4], 1
    %29 = vsyncpa %s28, 0
    %30 = vsyncpa [#allocation16], 0
    %s31 = scalar_lea.sflag [#allocation16], 1
    %32 = vsyncpa %s31, 0
    loop: start=0, step=1, limit=4
    $region2: #{tpu_custom_call.1} parent=1 // loop_pre_header
      _
    $region3: #{tpu_custom_call.1} parent=1 // loop_header
      %s34 = sphi 0, %s38
      %p35 = scmp.ge.s32.totalorder %s34, 4
      %s44 = sphi 0, %s46
      %s47 = sphi 0, %s44
      %s48 = sphi 0, %s47
      %s64 = sphi 0, %s48
      %s70 = sphi 0, %s72
      %s73 = sphi 0, %s70
      %s74 = sphi 0, %s73
      %s90 = sphi 0, %s74
      %s96 = sphi 0, %s98
      %s99 = sphi 0, %s96
      %s100 = sphi 0, %s99
      %s116 = sphi 0, %s100
      %s122 = sphi 0, %s124
      %s125 = sphi 0, %s122
      %s126 = sphi 0, %s125
      %s142 = sphi 0, %s126
      %s146 = sphi 0, %s146
      %s148 = sphi 0, %s146
      %s149 = sphi 0, %s148
      %s163 = sphi 0, %s149
      %s167 = sphi 0, %s167
      %s169 = sphi 0, %s167
      %s170 = sphi 0, %s169
      %s184 = sphi 0, %s170
      %s188 = sphi 0, %s188
      %s190 = sphi 0, %s188
      %s191 = sphi 0, %s190
      %s205 = sphi 0, %s191
      %s209 = sphi 0, %s209
      %s211 = sphi 0, %s209
      %s212 = sphi 0, %s211
      %s226 = sphi 0, %s212
      %s230 = sphi 0, %s230
      %s232 = sphi 0, %s230
      %s233 = sphi 0, %s232
      %s247 = sphi 0, %s233
      %s251 = sphi 0, %s251
      %s253 = sphi 0, %s251
      %s254 = sphi 0, %s253
      %s268 = sphi 0, %s254
      %s272 = sphi 0, %s272
      %s274 = sphi 0, %s272
      %s275 = sphi 0, %s274
      %s289 = sphi 0, %s275
      %s295 = sphi 0, %s297
      %s298 = sphi 0, %s295
      %s299 = sphi 0, %s298
      %s315 = sphi 0, %s299
      %s321 = sphi 0, %s323
      %s324 = sphi 0, %s321
      %s325 = sphi 0, %s324
      %s341 = sphi 0, %s325
      %s347 = sphi 0, %s349
      %s350 = sphi 0, %s347
      %s351 = sphi 0, %s350
      %s367 = sphi 0, %s351
    $region4: #{tpu_custom_call.1} parent=1 // loop_header_branch
      %37 = sbr.rel (%p35) target = $region8
    $region5: #{tpu_custom_call.1} parent=1 // loop_body
      %s39 = ssub.s32 %s34, 1
      %s40 = ssub.s32 %s34, 2
      %s41 = sadd.s32 %s34, 1
      %s42 = ssub.s32 %s34, %s41
      %p43 = scmp.eq.s32.totalorder %s42, 0
      %s45 = sadd.s32 %s44, 1
      %s46 = scalar_select %p43, %s44, %s45
      %p49 = pneg %p43
      %p50 = scmp.eq.s32.totalorder %s34, 1
      %p51 = por %p49, %p50
      %p52 = scmp.ne.s32.totalorder %s44, %s47
      %p53 = scmp.eq.s32.totalorder %s34, 0
      %p54 = por %p52, %p53
      %p55 = scmp.ne.s32.totalorder %s44, %s47
      %p56 = scmp.eq.s32.totalorder %s39, 1
      %p57 = por %p55, %p56
      %p58 = scmp.ne.s32.totalorder %s47, %s48
      %p59 = scmp.eq.s32.totalorder %s39, 0
      %p60 = por %p58, %p59
      %p61 = scmp.ne.s32.totalorder %s47, %s48
      %p62 = scmp.eq.s32.totalorder %s40, 1
      %p63 = por %p61, %p62
      %p65 = scmp.ne.s32.totalorder %s48, %s64
      %p66 = scmp.eq.s32.totalorder %s40, 0
      %p67 = por %p65, %p66
      %s68 = ssub.s32 %s34, %s41
      %p69 = scmp.eq.s32.totalorder %s68, 0
      %s71 = sadd.s32 %s70, 1
      %s72 = scalar_select %p69, %s70, %s71
      %p75 = pneg %p69
      %p76 = scmp.eq.s32.totalorder %s34, 1
      %p77 = por %p75, %p76
      %p78 = scmp.ne.s32.totalorder %s70, %s73
      %p79 = scmp.eq.s32.totalorder %s34, 0
      %p80 = por %p78, %p79
      %p81 = scmp.ne.s32.totalorder %s70, %s73
      %p82 = scmp.eq.s32.totalorder %s39, 1
      %p83 = por %p81, %p82
      %p84 = scmp.ne.s32.totalorder %s73, %s74
      %p85 = scmp.eq.s32.totalorder %s39, 0
      %p86 = por %p84, %p85
      %p87 = scmp.ne.s32.totalorder %s73, %s74
      %p88 = scmp.eq.s32.totalorder %s40, 1
      %p89 = por %p87, %p88
      %p91 = scmp.ne.s32.totalorder %s74, %s90
      %p92 = scmp.eq.s32.totalorder %s40, 0
      %p93 = por %p91, %p92
      %s94 = ssub.s32 %s34, %s41
      %p95 = scmp.eq.s32.totalorder %s94, 0
      %s97 = sadd.s32 %s96, 1
      %s98 = scalar_select %p95, %s96, %s97
      %p101 = pneg %p95
      %p102 = scmp.eq.s32.totalorder %s34, 1
      %p103 = por %p101, %p102
      %p104 = scmp.ne.s32.totalorder %s96, %s99
      %p105 = scmp.eq.s32.totalorder %s34, 0
      %p106 = por %p104, %p105
      %p107 = scmp.ne.s32.totalorder %s96, %s99
      %p108 = scmp.eq.s32.totalorder %s39, 1
      %p109 = por %p107, %p108
      %p110 = scmp.ne.s32.totalorder %s99, %s100
      %p111 = scmp.eq.s32.totalorder %s39, 0
      %p112 = por %p110, %p111
      %p113 = scmp.ne.s32.totalorder %s99, %s100
      %p114 = scmp.eq.s32.totalorder %s40, 1
      %p115 = por %p113, %p114
      %p117 = scmp.ne.s32.totalorder %s100, %s116
      %p118 = scmp.eq.s32.totalorder %s40, 0
      %p119 = por %p117, %p118
      %s120 = ssub.s32 %s34, %s41
      %p121 = scmp.eq.s32.totalorder %s120, 0
      %s123 = sadd.s32 %s122, 1
      %s124 = scalar_select %p121, %s122, %s123
      %p127 = pneg %p121
      %p128 = scmp.eq.s32.totalorder %s34, 1
      %p129 = por %p127, %p128
      %p130 = scmp.ne.s32.totalorder %s122, %s125
      %p131 = scmp.eq.s32.totalorder %s34, 0
      %p132 = por %p130, %p131
      %p133 = scmp.ne.s32.totalorder %s122, %s125
      %p134 = scmp.eq.s32.totalorder %s39, 1
      %p135 = por %p133, %p134
      %p136 = scmp.ne.s32.totalorder %s125, %s126
      %p137 = scmp.eq.s32.totalorder %s39, 0
      %p138 = por %p136, %p137
      %p139 = scmp.ne.s32.totalorder %s125, %s126
      %p140 = scmp.eq.s32.totalorder %s40, 1
      %p141 = por %p139, %p140
      %p143 = scmp.ne.s32.totalorder %s126, %s142
      %p144 = scmp.eq.s32.totalorder %s40, 0
      %p145 = por %p143, %p144
      %s147 = sadd.s32 %s146, 1
      %p150 = scmp.eq.s32.totalorder %s34, 1
      %p151 = scmp.ne.s32.totalorder %s146, %s148
      %p152 = scmp.eq.s32.totalorder %s34, 0
      %p153 = por %p151, %p152
      %p154 = scmp.ne.s32.totalorder %s146, %s148
      %p155 = scmp.eq.s32.totalorder %s39, 1
      %p156 = por %p154, %p155
      %p157 = scmp.ne.s32.totalorder %s148, %s149
      %p158 = scmp.eq.s32.totalorder %s39, 0
      %p159 = por %p157, %p158
      %p160 = scmp.ne.s32.totalorder %s148, %s149
      %p161 = scmp.eq.s32.totalorder %s40, 1
      %p162 = por %p160, %p161
      %p164 = scmp.ne.s32.totalorder %s149, %s163
      %p165 = scmp.eq.s32.totalorder %s40, 0
      %p166 = por %p164, %p165
      %s168 = sadd.s32 %s167, 1
      %p171 = scmp.eq.s32.totalorder %s34, 1
      %p172 = scmp.ne.s32.totalorder %s167, %s169
      %p173 = scmp.eq.s32.totalorder %s34, 0
      %p174 = por %p172, %p173
      %p175 = scmp.ne.s32.totalorder %s167, %s169
      %p176 = scmp.eq.s32.totalorder %s39, 1
      %p177 = por %p175, %p176
      %p178 = scmp.ne.s32.totalorder %s169, %s170
      %p179 = scmp.eq.s32.totalorder %s39, 0
      %p180 = por %p178, %p179
      %p181 = scmp.ne.s32.totalorder %s169, %s170
      %p182 = scmp.eq.s32.totalorder %s40, 1
      %p183 = por %p181, %p182
      %p185 = scmp.ne.s32.totalorder %s170, %s184
      %p186 = scmp.eq.s32.totalorder %s40, 0
      %p187 = por %p185, %p186
      %s189 = sadd.s32 %s188, 1
      %p192 = scmp.eq.s32.totalorder %s34, 1
      %p193 = scmp.ne.s32.totalorder %s188, %s190
      %p194 = scmp.eq.s32.totalorder %s34, 0
      %p195 = por %p193, %p194
      %p196 = scmp.ne.s32.totalorder %s188, %s190
      %p197 = scmp.eq.s32.totalorder %s39, 1
      %p198 = por %p196, %p197
      %p199 = scmp.ne.s32.totalorder %s190, %s191
      %p200 = scmp.eq.s32.totalorder %s39, 0
      %p201 = por %p199, %p200
      %p202 = scmp.ne.s32.totalorder %s190, %s191
      %p203 = scmp.eq.s32.totalorder %s40, 1
      %p204 = por %p202, %p203
      %p206 = scmp.ne.s32.totalorder %s191, %s205
      %p207 = scmp.eq.s32.totalorder %s40, 0
      %p208 = por %p206, %p207
      %s210 = sadd.s32 %s209, 1
      %p213 = scmp.eq.s32.totalorder %s34, 1
      %p214 = scmp.ne.s32.totalorder %s209, %s211
      %p215 = scmp.eq.s32.totalorder %s34, 0
      %p216 = por %p214, %p215
      %p217 = scmp.ne.s32.totalorder %s209, %s211
      %p218 = scmp.eq.s32.totalorder %s39, 1
      %p219 = por %p217, %p218
      %p220 = scmp.ne.s32.totalorder %s211, %s212
      %p221 = scmp.eq.s32.totalorder %s39, 0
      %p222 = por %p220, %p221
      %p223 = scmp.ne.s32.totalorder %s211, %s212
      %p224 = scmp.eq.s32.totalorder %s40, 1
      %p225 = por %p223, %p224
      %p227 = scmp.ne.s32.totalorder %s212, %s226
      %p228 = scmp.eq.s32.totalorder %s40, 0
      %p229 = por %p227, %p228
      %s231 = sadd.s32 %s230, 1
      %p234 = scmp.eq.s32.totalorder %s34, 1
      %p235 = scmp.ne.s32.totalorder %s230, %s232
      %p236 = scmp.eq.s32.totalorder %s34, 0
      %p237 = por %p235, %p236
      %p238 = scmp.ne.s32.totalorder %s230, %s232
      %p239 = scmp.eq.s32.totalorder %s39, 1
      %p240 = por %p238, %p239
      %p241 = scmp.ne.s32.totalorder %s232, %s233
      %p242 = scmp.eq.s32.totalorder %s39, 0
      %p243 = por %p241, %p242
      %p244 = scmp.ne.s32.totalorder %s232, %s233
      %p245 = scmp.eq.s32.totalorder %s40, 1
      %p246 = por %p244, %p245
      %p248 = scmp.ne.s32.totalorder %s233, %s247
      %p249 = scmp.eq.s32.totalorder %s40, 0
      %p250 = por %p248, %p249
      %s252 = sadd.s32 %s251, 1
      %p255 = scmp.eq.s32.totalorder %s34, 1
      %p256 = scmp.ne.s32.totalorder %s251, %s253
      %p257 = scmp.eq.s32.totalorder %s34, 0
      %p258 = por %p256, %p257
      %p259 = scmp.ne.s32.totalorder %s251, %s253
      %p260 = scmp.eq.s32.totalorder %s39, 1
      %p261 = por %p259, %p260
      %p262 = scmp.ne.s32.totalorder %s253, %s254
      %p263 = scmp.eq.s32.totalorder %s39, 0
      %p264 = por %p262, %p263
      %p265 = scmp.ne.s32.totalorder %s253, %s254
      %p266 = scmp.eq.s32.totalorder %s40, 1
      %p267 = por %p265, %p266
      %p269 = scmp.ne.s32.totalorder %s254, %s268
      %p270 = scmp.eq.s32.totalorder %s40, 0
      %p271 = por %p269, %p270
      %s273 = sadd.s32 %s272, 1
      %p276 = scmp.eq.s32.totalorder %s34, 1
      %p277 = scmp.ne.s32.totalorder %s272, %s274
      %p278 = scmp.eq.s32.totalorder %s34, 0
      %p279 = por %p277, %p278
      %p280 = scmp.ne.s32.totalorder %s272, %s274
      %p281 = scmp.eq.s32.totalorder %s39, 1
      %p282 = por %p280, %p281
      %p283 = scmp.ne.s32.totalorder %s274, %s275
      %p284 = scmp.eq.s32.totalorder %s39, 0
      %p285 = por %p283, %p284
      %p286 = scmp.ne.s32.totalorder %s274, %s275
      %p287 = scmp.eq.s32.totalorder %s40, 1
      %p288 = por %p286, %p287
      %p290 = scmp.ne.s32.totalorder %s275, %s289
      %p291 = scmp.eq.s32.totalorder %s40, 0
      %p292 = por %p290, %p291
      %s293 = ssub.s32 %s34, %s41
      %p294 = scmp.eq.s32.totalorder %s293, 0
      %s296 = sadd.s32 %s295, 1
      %s297 = scalar_select %p294, %s295, %s296
      %p300 = pneg %p294
      %p301 = scmp.eq.s32.totalorder %s34, 1
      %p302 = por %p300, %p301
      %p303 = scmp.ne.s32.totalorder %s295, %s298
      %p304 = scmp.eq.s32.totalorder %s34, 0
      %p305 = por %p303, %p304
      %p306 = scmp.ne.s32.totalorder %s295, %s298
      %p307 = scmp.eq.s32.totalorder %s39, 1
      %p308 = por %p306, %p307
      %p309 = scmp.ne.s32.totalorder %s298, %s299
      %p310 = scmp.eq.s32.totalorder %s39, 0
      %p311 = por %p309, %p310
      %p312 = scmp.ne.s32.totalorder %s298, %s299
      %p313 = scmp.eq.s32.totalorder %s40, 1
      %p314 = por %p312, %p313
      %p316 = scmp.ne.s32.totalorder %s299, %s315
      %p317 = scmp.eq.s32.totalorder %s40, 0
      %p318 = por %p316, %p317
      %s319 = ssub.s32 %s34, %s41
      %p320 = scmp.eq.s32.totalorder %s319, 0
      %s322 = sadd.s32 %s321, 1
      %s323 = scalar_select %p320, %s321, %s322
      %p326 = pneg %p320
      %p327 = scmp.eq.s32.totalorder %s34, 1
      %p328 = por %p326, %p327
      %p329 = scmp.ne.s32.totalorder %s321, %s324
      %p330 = scmp.eq.s32.totalorder %s34, 0
      %p331 = por %p329, %p330
      %p332 = scmp.ne.s32.totalorder %s321, %s324
      %p333 = scmp.eq.s32.totalorder %s39, 1
      %p334 = por %p332, %p333
      %p335 = scmp.ne.s32.totalorder %s324, %s325
      %p336 = scmp.eq.s32.totalorder %s39, 0
      %p337 = por %p335, %p336
      %p338 = scmp.ne.s32.totalorder %s324, %s325
      %p339 = scmp.eq.s32.totalorder %s40, 1
      %p340 = por %p338, %p339
      %p342 = scmp.ne.s32.totalorder %s325, %s341
      %p343 = scmp.eq.s32.totalorder %s40, 0
      %p344 = por %p342, %p343
      %s345 = ssub.s32 %s34, %s41
      %p346 = scmp.eq.s32.totalorder %s345, 0
      %s348 = sadd.s32 %s347, 1
      %s349 = scalar_select %p346, %s347, %s348
      %p352 = pneg %p346
      %p353 = scmp.eq.s32.totalorder %s34, 1
      %p354 = por %p352, %p353
      %p355 = scmp.ne.s32.totalorder %s347, %s350
      %p356 = scmp.eq.s32.totalorder %s34, 0
      %p357 = por %p355, %p356
      %p358 = scmp.ne.s32.totalorder %s347, %s350
      %p359 = scmp.eq.s32.totalorder %s39, 1
      %p360 = por %p358, %p359
      %p361 = scmp.ne.s32.totalorder %s350, %s351
      %p362 = scmp.eq.s32.totalorder %s39, 0
      %p363 = por %p361, %p362
      %p364 = scmp.ne.s32.totalorder %s350, %s351
      %p365 = scmp.eq.s32.totalorder %s40, 1
      %p366 = por %p364, %p365
      %p368 = scmp.ne.s32.totalorder %s351, %s367
      %p369 = scmp.eq.s32.totalorder %s40, 0
      %p370 = por %p368, %p369
      %p371 = scmp.le.s32.totalorder 1, %s34
      %p372 = scmp.lt.s32.totalorder %s34, 3
      %p373 = pnand %p371, %p372
      %p374 = pneg %p373
      // Predicated region
      $region9: #{tpu_custom_call.1} parent=5 // pred_check
        _
      $region10: #{tpu_custom_call.1} parent=5 // pred_check_branch
        %376 = sbr.rel (%p373) target = $region12
      $region11: #{tpu_custom_call.1} parent=5 // pred_region
        %s377 = ssub.s32 %s34, 1
        // Predicated region
        $region13: #{tpu_custom_call.1} parent=11 // pred_check
          %p378 = pneg %p159
        $region14: #{tpu_custom_call.1} parent=11 // pred_check_branch
          %380 = sbr.rel (%p378) target = $region16
        $region15: #{tpu_custom_call.1} parent=11 // pred_region
          _
        $region16: #{tpu_custom_call.1} parent=11 // pred_fallthru
          _
        // Predicated region
        $region17: #{tpu_custom_call.1} parent=11 // pred_check
          %p381 = pneg %p180
        $region18: #{tpu_custom_call.1} parent=11 // pred_check_branch
          %383 = sbr.rel (%p381) target = $region20
        $region19: #{tpu_custom_call.1} parent=11 // pred_region
          %s385 = ssub.s32 512, 512
          %386 = vsyncadd [#allocation6], %s385
          %s387 = sshll.u32 [#allocation7], 4
          %s388 = int_to_ptr.vmem [resolvable:$true] %s387
          %393 = dma.hbm_to_vmem [thread:$0]  %s5, 512, %s388, [#allocation6], 128, 128, 8
        $region20: #{tpu_custom_call.1} parent=11 // pred_fallthru
          _
        // Predicated region
        $region21: #{tpu_custom_call.1} parent=11 // pred_check
          %p394 = pneg %p201
        $region22: #{tpu_custom_call.1} parent=11 // pred_check_branch
          %396 = sbr.rel (%p394) target = $region24
        $region23: #{tpu_custom_call.1} parent=11 // pred_region
          %s398 = ssub.s32 16, 16
          %399 = vsyncadd [#allocation9], %s398
          %s401 = sshll.u32 [#allocation8], 4
          %s402 = int_to_ptr.vmem [resolvable:$true] %s401
          %404 = dma.hbm_to_vmem [thread:$0]  %s6, 16, %s402, [#allocation9]
        $region24: #{tpu_custom_call.1} parent=11 // pred_fallthru
          _
        // Predicated region
        $region25: #{tpu_custom_call.1} parent=11 // pred_check
          %p405 = pneg %p222
        $region26: #{tpu_custom_call.1} parent=11 // pred_check_branch
          %407 = sbr.rel (%p405) target = $region28
        $region27: #{tpu_custom_call.1} parent=11 // pred_region
          %s409 = ssub.s32 16, 16
          %410 = vsyncadd [#allocation9], %s409
          %s412 = sshll.u32 [#allocation10], 4
          %s413 = int_to_ptr.vmem [resolvable:$true] %s412
          %415 = dma.hbm_to_vmem [thread:$0]  %s7, 16, %s413, [#allocation9]
        $region28: #{tpu_custom_call.1} parent=11 // pred_fallthru
          _
        // Predicated region
        $region29: #{tpu_custom_call.1} parent=11 // pred_check
          %p416 = pneg %p243
        $region30: #{tpu_custom_call.1} parent=11 // pred_check_branch
          %418 = sbr.rel (%p416) target = $region32
        $region31: #{tpu_custom_call.1} parent=11 // pred_region
          %s420 = ssub.s32 16, 16
          %421 = vsyncadd [#allocation12], %s420
          %s423 = sshll.u32 [#allocation11], 4
          %s424 = int_to_ptr.vmem [resolvable:$true] %s423
          %426 = dma.hbm_to_vmem [thread:$0]  %s8, 16, %s424, [#allocation12]
        $region32: #{tpu_custom_call.1} parent=11 // pred_fallthru
          _
        // Predicated region
        $region33: #{tpu_custom_call.1} parent=11 // pred_check
          %p427 = pneg %p264
        $region34: #{tpu_custom_call.1} parent=11 // pred_check_branch
          %429 = sbr.rel (%p427) target = $region36
        $region35: #{tpu_custom_call.1} parent=11 // pred_region
          _
        $region36: #{tpu_custom_call.1} parent=11 // pred_fallthru
          _
        // Predicated region
        $region37: #{tpu_custom_call.1} parent=11 // pred_check
          %p430 = pneg %p285
        $region38: #{tpu_custom_call.1} parent=11 // pred_check_branch
          %432 = sbr.rel (%p430) target = $region40
        $region39: #{tpu_custom_call.1} parent=11 // pred_region
          %s434 = ssub.s32 512, 512
          %435 = vsyncadd [#allocation12], %s434
          %s436 = sshll.u32 [#allocation13], 4
          %s437 = int_to_ptr.vmem [resolvable:$true] %s436
          %442 = dma.hbm_to_vmem [thread:$0]  %s10, 512, %s437, [#allocation12], 128, 128, 8
        $region40: #{tpu_custom_call.1} parent=11 // pred_fallthru
          _
      $region12: #{tpu_custom_call.1} parent=5 // pred_fallthru
        _
      %p443 = scmp.lt.s32.totalorder %s34, 2
      // Predicated region
      $region41: #{tpu_custom_call.1} parent=5 // pred_check
        %p444 = pneg %p443
      $region42: #{tpu_custom_call.1} parent=5 // pred_check_branch
        %446 = sbr.rel (%p444) target = $region44
      $region43: #{tpu_custom_call.1} parent=5 // pred_region
        // Predicated region
        $region45: #{tpu_custom_call.1} parent=43 // pred_check
          %p447 = pneg %p54
        $region46: #{tpu_custom_call.1} parent=43 // pred_check_branch
          %449 = sbr.rel (%p447) target = $region48
        $region47: #{tpu_custom_call.1} parent=43 // pred_region
          %s450 = sand.u32 %s44, 1
          %s451 = scalar_lea.sflag [#allocation3], %s450
          %s452 = sand.u32 %s44, 1
          %s453 = smul.addr %s452, 8
          %s454 = scalar_lea.vmem [#allocation2], %s453
          %s456 = ssub.s32 128, 128
          %457 = vsyncadd %s451, %s456
          %s458 = smul.addr %s34, 128
          %s459 = scalar_lea.hbm %s0, %s458
          %s461 = sshll.u32 %s454, 4
          %s462 = int_to_ptr.vmem [resolvable:$true] %s461
          %464 = dma.hbm_to_vmem [thread:$0]  %s459, 128, %s462, %s451
        $region48: #{tpu_custom_call.1} parent=43 // pred_fallthru
          _
        // Predicated region
        $region49: #{tpu_custom_call.1} parent=43 // pred_check
          %p465 = pneg %p80
        $region50: #{tpu_custom_call.1} parent=43 // pred_check_branch
          %467 = sbr.rel (%p465) target = $region52
        $region51: #{tpu_custom_call.1} parent=43 // pred_region
          %s468 = sand.u32 %s34, 1
          %s469 = scalar_lea.sflag [#allocation6], %s468
          %s470 = sand.u32 %s70, 1
          %s471 = smul.addr %s470, 64
          %s472 = scalar_lea.vmem [#allocation5], %s471
          %s473 = smul.u32 8, %s34
          %s475 = ssub.s32 1024, 1024
          %476 = vsyncadd %s469, %s475
          %s477 = smul.addr %s473, 128
          %s478 = scalar_lea.hbm %s1, %s477
          %s479 = sshll.u32 %s472, 4
          %s480 = int_to_ptr.vmem [resolvable:$true] %s479
          %485 = dma.hbm_to_vmem [thread:$0]  %s478, 1024, %s480, %s469, 128, 128, 8
        $region52: #{tpu_custom_call.1} parent=43 // pred_fallthru
          _
        // Predicated region
        $region53: #{tpu_custom_call.1} parent=43 // pred_check
          %p486 = pneg %p106
        $region54: #{tpu_custom_call.1} parent=43 // pred_check_branch
          %488 = sbr.rel (%p486) target = $region56
        $region55: #{tpu_custom_call.1} parent=43 // pred_region
          %p489 = scmp.lt.s32.totalorder %s34, 1
          %s490 = scalar_select %p489, %s34, 1
          %s491 = smul.addr %s490, 8
          %s492 = scalar_lea.vmem %s2, %s491
        $region56: #{tpu_custom_call.1} parent=43 // pred_fallthru
          _
        // Predicated region
        $region57: #{tpu_custom_call.1} parent=43 // pred_check
          %p493 = pneg %p132
        $region58: #{tpu_custom_call.1} parent=43 // pred_check_branch
          %495 = sbr.rel (%p493) target = $region60
        $region59: #{tpu_custom_call.1} parent=43 // pred_region
          %p496 = scmp.lt.s32.totalorder %s34, 1
          %s497 = scalar_select %p496, %s34, 1
          %s498 = smul.addr %s497, 8
          %s499 = scalar_lea.vmem %s3, %s498
        $region60: #{tpu_custom_call.1} parent=43 // pred_fallthru
          _
      $region44: #{tpu_custom_call.1} parent=5 // pred_fallthru
        _
      %p500 = scmp.le.s32.totalorder 1, %s34
      %p501 = scmp.lt.s32.totalorder %s34, 3
      %p502 = pnand %p500, %p501
      %p503 = pneg %p502
      // Predicated region
      $region61: #{tpu_custom_call.1} parent=5 // pred_check
        _
      $region62: #{tpu_custom_call.1} parent=5 // pred_check_branch
        %505 = sbr.rel (%p502) target = $region64
      $region63: #{tpu_custom_call.1} parent=5 // pred_region
        %s506 = ssub.s32 %s34, 1
        %s507 = sand.u32 %s47, 1
        %s508 = scalar_lea.sflag [#allocation3], %s507
        %s509 = sand.u32 %s47, 1
        %s510 = smul.addr %s509, 8
        %s511 = scalar_lea.vmem [#allocation2], %s510
        // Predicated region
        $region65: #{tpu_custom_call.1} parent=63 // pred_check
          %p512 = pneg %p60
        $region66: #{tpu_custom_call.1} parent=63 // pred_check_branch
          %514 = sbr.rel (%p512) target = $region68
        $region67: #{tpu_custom_call.1} parent=63 // pred_region
          %515 = dma.done %s508, 128
        $region68: #{tpu_custom_call.1} parent=63 // pred_fallthru
          _
        %s516 = sand.u32 %s39, 1
        %s517 = scalar_lea.sflag [#allocation6], %s516
        %s518 = sand.u32 %s73, 1
        %s519 = smul.addr %s518, 64
        %s520 = scalar_lea.vmem [#allocation5], %s519
        // Predicated region
        $region69: #{tpu_custom_call.1} parent=63 // pred_check
          %p521 = pneg %p86
        $region70: #{tpu_custom_call.1} parent=63 // pred_check_branch
          %523 = sbr.rel (%p521) target = $region72
        $region71: #{tpu_custom_call.1} parent=63 // pred_region
          %524 = dma.done %s517, 1024
        $region72: #{tpu_custom_call.1} parent=63 // pred_fallthru
          _
        // Predicated region
        $region73: #{tpu_custom_call.1} parent=63 // pred_check
          %p525 = pneg %p180
        $region74: #{tpu_custom_call.1} parent=63 // pred_check_branch
          %527 = sbr.rel (%p525) target = $region76
        $region75: #{tpu_custom_call.1} parent=63 // pred_region
          %528 = dma.done [#allocation6], 512
        $region76: #{tpu_custom_call.1} parent=63 // pred_fallthru
          _
        // Predicated region
        $region77: #{tpu_custom_call.1} parent=63 // pred_check
          %p529 = pneg %p201
        $region78: #{tpu_custom_call.1} parent=63 // pred_check_branch
          %531 = sbr.rel (%p529) target = $region80
        $region79: #{tpu_custom_call.1} parent=63 // pred_region
          %532 = dma.done [#allocation9], 16
        $region80: #{tpu_custom_call.1} parent=63 // pred_fallthru
          _
        // Predicated region
        $region81: #{tpu_custom_call.1} parent=63 // pred_check
          %p533 = pneg %p222
        $region82: #{tpu_custom_call.1} parent=63 // pred_check_branch
          %535 = sbr.rel (%p533) target = $region84
        $region83: #{tpu_custom_call.1} parent=63 // pred_region
          %536 = dma.done [#allocation9], 16
        $region84: #{tpu_custom_call.1} parent=63 // pred_fallthru
          _
        // Predicated region
        $region85: #{tpu_custom_call.1} parent=63 // pred_check
          %p537 = pneg %p243
        $region86: #{tpu_custom_call.1} parent=63 // pred_check_branch
          %539 = sbr.rel (%p537) target = $region88
        $region87: #{tpu_custom_call.1} parent=63 // pred_region
          %540 = dma.done [#allocation12], 16
        $region88: #{tpu_custom_call.1} parent=63 // pred_fallthru
          _
        // Predicated region
        $region89: #{tpu_custom_call.1} parent=63 // pred_check
          %p541 = pneg %p285
        $region90: #{tpu_custom_call.1} parent=63 // pred_check_branch
          %543 = sbr.rel (%p541) target = $region92
        $region91: #{tpu_custom_call.1} parent=63 // pred_region
          %544 = dma.done [#allocation12], 512
        $region92: #{tpu_custom_call.1} parent=63 // pred_fallthru
          _
        %s545 = sand.u32 %s47, 1
        %s546 = scalar_lea.sflag [#allocation3], %s545
        %s547 = sand.u32 %s47, 1
        %s548 = smul.addr %s547, 8
        %s549 = scalar_lea.vmem [#allocation2], %s548
        %p550 = pneg %p60
        %p551 = pneg %p57
        %s552 = sand.u32 %s39, 1
        %s553 = scalar_lea.sflag [#allocation6], %s552
        %s554 = sand.u32 %s73, 1
        %s555 = smul.addr %s554, 64
        %s556 = scalar_lea.vmem [#allocation5], %s555
        %p557 = pneg %p86
        %p558 = pneg %p83
        %p559 = scmp.lt.s32.totalorder %s39, 1
        %s560 = scalar_select %p559, %s39, 1
        %s561 = smul.addr %s560, 8
        %s562 = scalar_lea.vmem %s2, %s561
        %p563 = pneg %p112
        %p564 = pneg %p109
        %p565 = scmp.lt.s32.totalorder %s39, 1
        %s566 = scalar_select %p565, %s39, 1
        %s567 = smul.addr %s566, 8
        %s568 = scalar_lea.vmem %s3, %s567
        %p569 = pneg %p138
        %p570 = pneg %p135
        %p571 = pneg %p159
        %p572 = pneg %p156
        %p573 = pneg %p180
        %p574 = pneg %p177
        %p575 = pneg %p201
        %p576 = pneg %p198
        %p577 = pneg %p222
        %p578 = pneg %p219
        %p579 = pneg %p243
        %p580 = pneg %p240
        %p581 = pneg %p264
        %p582 = pneg %p261
        %p583 = pneg %p285
        %p584 = pneg %p282
        %p585 = pneg %p311
        %p586 = pneg %p308
        %s587 = sand.u32 %s298, 1
        %s588 = scalar_lea.sflag [#allocation4], %s587
        %s589 = sand.u32 %s298, 1
        %s590 = smul.addr %s589, 8
        %s591 = scalar_lea.vmem [#allocation14], %s590
        %p592 = pneg %p337
        %p593 = pneg %p334
        %s594 = sand.u32 %s39, 1
        %s595 = scalar_lea.sflag [#allocation16], %s594
        %s596 = sand.u32 %s324, 1
        %s597 = smul.addr %s596, 8
        %s598 = scalar_lea.vmem [#allocation15], %s597
        %p599 = pneg %p363
        %p600 = pneg %p360
        %s601 = sand.u32 %s39, 1
        %s602 = scalar_lea.sflag [#allocation16], %s601
        %s603 = sand.u32 %s350, 1
        %s604 = smul.addr %s603, 8
        %s605 = scalar_lea.vmem [#allocation17], %s604
        %s606 = smul.u32 8, %s39
        %p607 = scmp.lt.s32.totalorder %s39, 1
        %s608 = scalar_select %p607, %s39, 1
        %s609 = smul.addr %s608, 8
        %s610 = scalar_lea.vmem %s2, %s609
        %p611 = scmp.lt.s32.totalorder %s39, 1
        %s612 = scalar_select %p611, %s39, 1
        %s613 = smul.addr %s612, 8
        %s614 = scalar_lea.vmem %s3, %s613
        %v615 = vld [vmem:[%s511] sm:$0xff]
        %v616 = vld [vmem:[%s520] sm:$0xff]
        %v617 = vld [vmem:[%s520 + $0x8] sm:$0xff]
        %v618 = vld [vmem:[%s520 + $0x10] sm:$0xff]
        %v619 = vld [vmem:[%s520 + $0x18] sm:$0xff]
        %v620 = vld [vmem:[%s520 + $0x20] sm:$0xff]
        %v621 = vld [vmem:[%s520 + $0x28] sm:$0xff]
        %v622 = vld [vmem:[%s520 + $0x30] sm:$0xff]
        %v623 = vld [vmem:[%s520 + $0x38] sm:$0xff]
        %v624 = vld [vmem:[%s610] sm:$0xff]
        %v625 = vld [vmem:[%s614] sm:$0xff]
        %v626 = vld [vmem:[%s4] sm:$0xff]
        %v627 = vld [vmem:[%s4 + $0x8] sm:$0xff]
        %v628 = vld [vmem:[%s4 + $0x10] sm:$0xff]
        %v629 = vld [vmem:[%s4 + $0x18] sm:$0xff]
        %vm630 = vcmask 261120
        %v632 = vsel %vm630, %v615, 0
        %634 = vmatprep.subr.mxu0 0.0
        %635 = vmatpush1.msra.mxu0 0.0
        %636 = vmatprep.subr.mxu0 0.0
        %637 = vmatpush1.msra.mxu0 0.0
        %638 = vmatprep.subr.mxu0 0.0
        %639 = vmatpush1.msra.mxu0 0.0
        %640 = vmatprep.subr.mxu0 0.0
        %641 = vmatpush1.msra.mxu0 0.0
        %642 = vmatprep.subr.mxu0 0.0
        %643 = vmatpush1.msra.mxu0 0.0
        %644 = vmatprep.subr.mxu0 0.0
        %645 = vmatpush1.msra.mxu0 0.0
        %646 = vmatprep.subr.mxu0 0.0
        %647 = vmatpush1.msra.mxu0 0.0
        %648 = vmatprep.subr.mxu0 0.0
        %649 = vmatpush1.msra.mxu0 0.0
        %650 = vmatprep.subr.mxu0 0.0
        %651 = vmatpush1.msra.mxu0 0.0
        %652 = vmatprep.subr.mxu0 0.0
        %653 = vmatpush1.msra.mxu0 0.0
        %654 = vmatprep.subr.mxu0 0.0
        %655 = vmatpush1.msra.mxu0 0.0
        %656 = vmatprep.subr.mxu0 0.0
        %657 = vmatpush1.msra.mxu0 0.0
        %658 = vmatprep.subr.mxu0 0.0
        %659 = vmatpush1.msra.mxu0 %v629
        %660 = vmatprep.subr.mxu0 0.0
        %661 = vmatpush1.msra.mxu0 %v628
        %662 = vmatprep.subr.mxu0 0.0
        %663 = vmatpush1.msra.mxu0 %v627
        %664 = vmatprep.subr.mxu0 0.0
        %665 = vmatpush1.msra.mxu0 %v626
        %666 = vmatprep.subr.mxu0 0.0
        %667 = vmatpush2.msra.mxu0 0.0
        %668 = vmatprep.subr.mxu0 0.0
        %669 = vmatpush2.msra.mxu0 0.0
        %670 = vmatprep.subr.mxu0 0.0
        %671 = vmatpush2.msra.mxu0 0.0
        %672 = vmatprep.subr.mxu0 0.0
        %673 = vmatpush2.msra.mxu0 0.0
        %674 = vmatprep.subr.mxu0 0.0
        %675 = vmatpush2.msra.mxu0 0.0
        %676 = vmatprep.subr.mxu0 0.0
        %677 = vmatpush2.msra.mxu0 0.0
        %678 = vmatprep.subr.mxu0 0.0
        %679 = vmatpush2.msra.mxu0 0.0
        %680 = vmatprep.subr.mxu0 0.0
        %681 = vmatpush2.msra.mxu0 0.0
        %682 = vmatprep.subr.mxu0 0.0
        %683 = vmatpush2.msra.mxu0 0.0
        %684 = vmatprep.subr.mxu0 0.0
        %685 = vmatpush2.msra.mxu0 0.0
        %686 = vmatprep.subr.mxu0 0.0
        %687 = vmatpush2.msra.mxu0 0.0
        %688 = vmatprep.subr.mxu0 0.0
        %689 = vmatpush2.msra.mxu0 0.0
        %690 = vmatprep.subr.mxu0 0.0
        %691 = vmatpush2.msra.mxu0 0.0
        %692 = vmatprep.subr.mxu0 0.0
        %693 = vmatpush2.msra.mxu0 0.0
        %694 = vmatprep.subr.mxu0 0.0
        %695 = vmatpush2.msra.mxu0 0.0
        %696 = vmatprep.subr.mxu0 0.0
        %697 = vmatpush2.msra.mxu0 0.0
        %698 = vmatprep.mubr.f32.mxu0 0.0
        %699 = vmatmul.mubr.f32.gmra.mxu0 %v632
        %v700 = vpop.f32.mrf.mxu0
        %v701 = vadd.f32 0.0, %v700
        %v702 = vpop.f32.mrf.mxu0
        %703 = vdwg.mxu0
        %v704 = vld [vmem:[#allocation7] sm:$0xff]
        %v705 = vld [vmem:[#allocation7 + $0x8] sm:$0xff]
        %v706 = vld [vmem:[#allocation7 + $0x10] sm:$0xff]
        %v707 = vld [vmem:[#allocation7 + $0x18] sm:$0xff]
        %v709 = vsel %vm630, %v616, 0
        %v712 = vsel %vm630, %v617, 0
        %v715 = vsel %vm630, %v618, 0
        %v718 = vsel %vm630, %v619, 0
        %v721 = vsel %vm630, %v620, 0
        %v724 = vsel %vm630, %v621, 0
        %v727 = vsel %vm630, %v622, 0
        %v730 = vsel %vm630, %v623, 0
        %732 = vmatprep.subr.mxu0 0.0
        %733 = vmatpush1.msra.mxu0 0.0
        %734 = vmatprep.subr.mxu0 0.0
        %735 = vmatpush1.msra.mxu0 0.0
        %736 = vmatprep.subr.mxu0 0.0
        %737 = vmatpush1.msra.mxu0 0.0
        %738 = vmatprep.subr.mxu0 0.0
        %739 = vmatpush1.msra.mxu0 0.0
        %740 = vmatprep.subr.mxu0 0.0
        %741 = vmatpush1.msra.mxu0 0.0
        %742 = vmatprep.subr.mxu0 0.0
        %743 = vmatpush1.msra.mxu0 0.0
        %744 = vmatprep.subr.mxu0 0.0
        %745 = vmatpush1.msra.mxu0 0.0
        %746 = vmatprep.subr.mxu0 0.0
        %747 = vmatpush1.msra.mxu0 0.0
        %748 = vmatprep.subr.mxu0 0.0
        %749 = vmatpush1.msra.mxu0 0.0
        %750 = vmatprep.subr.mxu0 0.0
        %751 = vmatpush1.msra.mxu0 0.0
        %752 = vmatprep.subr.mxu0 0.0
        %753 = vmatpush1.msra.mxu0 0.0
        %754 = vmatprep.subr.mxu0 0.0
        %755 = vmatpush1.msra.mxu0 0.0
        %756 = vmatprep.subr.mxu0 0.0
        %757 = vmatpush1.msra.mxu0 %v707
        %758 = vmatprep.subr.mxu0 0.0
        %759 = vmatpush1.msra.mxu0 %v706
        %760 = vmatprep.subr.mxu0 0.0
        %761 = vmatpush1.msra.mxu0 %v705
        %762 = vmatprep.subr.mxu0 0.0
        %763 = vmatpush1.msra.mxu0 %v704
        %764 = vmatprep.subr.mxu0 0.0
        %765 = vmatpush2.msra.mxu0 0.0
        %766 = vmatprep.subr.mxu0 0.0
        %767 = vmatpush2.msra.mxu0 0.0
        %768 = vmatprep.subr.mxu0 0.0
        %769 = vmatpush2.msra.mxu0 0.0
        %770 = vmatprep.subr.mxu0 0.0
        %771 = vmatpush2.msra.mxu0 0.0
        %772 = vmatprep.subr.mxu0 0.0
        %773 = vmatpush2.msra.mxu0 0.0
        %774 = vmatprep.subr.mxu0 0.0
        %775 = vmatpush2.msra.mxu0 0.0
        %776 = vmatprep.subr.mxu0 0.0
        %777 = vmatpush2.msra.mxu0 0.0
        %778 = vmatprep.subr.mxu0 0.0
        %779 = vmatpush2.msra.mxu0 0.0
        %780 = vmatprep.subr.mxu0 0.0
        %781 = vmatpush2.msra.mxu0 0.0
        %782 = vmatprep.subr.mxu0 0.0
        %783 = vmatpush2.msra.mxu0 0.0
        %784 = vmatprep.subr.mxu0 0.0
        %785 = vmatpush2.msra.mxu0 0.0
        %786 = vmatprep.subr.mxu0 0.0
        %787 = vmatpush2.msra.mxu0 0.0
        %788 = vmatprep.subr.mxu0 0.0
        %789 = vmatpush2.msra.mxu0 0.0
        %790 = vmatprep.subr.mxu0 0.0
        %791 = vmatpush2.msra.mxu0 0.0
        %792 = vmatprep.subr.mxu0 0.0
        %793 = vmatpush2.msra.mxu0 0.0
        %794 = vmatprep.subr.mxu0 0.0
        %795 = vmatpush2.msra.mxu0 0.0
        %796 = vmatprep.mubr.f32.mxu0 0.0
        %797 = vmatmul.mubr.f32.gmra.mxu0 %v709
        %v798 = vpop.f32.mrf.mxu0
        %v799 = vadd.f32 0.0, %v798
        %v800 = vpop.f32.mrf.mxu0
        %801 = vmatprep.mubr.f32.mxu0 0.0
        %802 = vmatmul.mubr.f32.gmra.mxu0 %v712
        %v803 = vpop.f32.mrf.mxu0
        %v804 = vadd.f32 0.0, %v803
        %v805 = vpop.f32.mrf.mxu0
        %806 = vmatprep.mubr.f32.mxu0 0.0
        %807 = vmatmul.mubr.f32.gmra.mxu0 %v715
        %v808 = vpop.f32.mrf.mxu0
        %v809 = vadd.f32 0.0, %v808
        %v810 = vpop.f32.mrf.mxu0
        %811 = vmatprep.mubr.f32.mxu0 0.0
        %812 = vmatmul.mubr.f32.gmra.mxu0 %v718
        %v813 = vpop.f32.mrf.mxu0
        %v814 = vadd.f32 0.0, %v813
        %v815 = vpop.f32.mrf.mxu0
        %816 = vmatprep.mubr.f32.mxu0 0.0
        %817 = vmatmul.mubr.f32.gmra.mxu0 %v721
        %v818 = vpop.f32.mrf.mxu0
        %v819 = vadd.f32 0.0, %v818
        %v820 = vpop.f32.mrf.mxu0
        %821 = vmatprep.mubr.f32.mxu0 0.0
        %822 = vmatmul.mubr.f32.gmra.mxu0 %v724
        %v823 = vpop.f32.mrf.mxu0
        %v824 = vadd.f32 0.0, %v823
        %v825 = vpop.f32.mrf.mxu0
        %826 = vmatprep.mubr.f32.mxu0 0.0
        %827 = vmatmul.mubr.f32.gmra.mxu0 %v727
        %v828 = vpop.f32.mrf.mxu0
        %v829 = vadd.f32 0.0, %v828
        %v830 = vpop.f32.mrf.mxu0
        %831 = vmatprep.mubr.f32.mxu0 0.0
        %832 = vmatmul.mubr.f32.gmra.mxu0 %v730
        %v833 = vpop.f32.mrf.mxu0
        %v834 = vadd.f32 0.0, %v833
        %v835 = vpop.f32.mrf.mxu0
        %836 = vdwg.mxu0
        %v837 = vld [vmem:[#allocation8] sm:$0x1]
        %v839 = vlaneseq
        %v840 = vshrl.u32 %v839, 7
        %v841 = vsub.s32 0, %v840
        %v842 = vrot.slane %v837, %v841
        %v844 = vadd.f32 %v799, %v842
        %v845 = vadd.f32 %v804, %v842
        %v846 = vadd.f32 %v809, %v842
        %v847 = vadd.f32 %v814, %v842
        %v848 = vadd.f32 %v819, %v842
        %v849 = vadd.f32 %v824, %v842
        %v850 = vadd.f32 %v829, %v842
        %v851 = vadd.f32 %v834, %v842
        %v852 = vlaneseq
        %v853 = vshrl.u32 %v852, 7
        %v854 = vsub.s32 0, %v853
        %v855 = vrot.slane %v624, %v854
        %857 = vbcast.lane.b32.xlu0 %v855, 256
        %v858 = vpop.permute.xlu0 %857
        %v859 = vlaneseq
        %v860 = vshrl.u32 %v859, 7
        %v861 = vsub.s32 1, %v860
        %v862 = vrot.slane %v624, %v861
        %864 = vbcast.lane.b32.xlu0 %v862, 256
        %v865 = vpop.permute.xlu0 %864
        %v866 = vlaneseq
        %v867 = vshrl.u32 %v866, 7
        %v868 = vsub.s32 2, %v867
        %v869 = vrot.slane %v624, %v868
        %871 = vbcast.lane.b32.xlu0 %v869, 256
        %v872 = vpop.permute.xlu0 %871
        %v873 = vlaneseq
        %v874 = vshrl.u32 %v873, 7
        %v875 = vsub.s32 3, %v874
        %v876 = vrot.slane %v624, %v875
        %878 = vbcast.lane.b32.xlu0 %v876, 256
        %v879 = vpop.permute.xlu0 %878
        %v880 = vlaneseq
        %v881 = vshrl.u32 %v880, 7
        %v882 = vsub.s32 4, %v881
        %v883 = vrot.slane %v624, %v882
        %885 = vbcast.lane.b32.xlu0 %v883, 256
        %v886 = vpop.permute.xlu0 %885
        %v887 = vlaneseq
        %v888 = vshrl.u32 %v887, 7
        %v889 = vsub.s32 5, %v888
        %v890 = vrot.slane %v624, %v889
        %892 = vbcast.lane.b32.xlu0 %v890, 256
        %v893 = vpop.permute.xlu0 %892
        %v894 = vlaneseq
        %v895 = vshrl.u32 %v894, 7
        %v896 = vsub.s32 6, %v895
        %v897 = vrot.slane %v624, %v896
        %899 = vbcast.lane.b32.xlu0 %v897, 256
        %v900 = vpop.permute.xlu0 %899
        %v901 = vlaneseq
        %v902 = vshrl.u32 %v901, 7
        %v903 = vsub.s32 7, %v902
        %v904 = vrot.slane %v624, %v903
        %906 = vbcast.lane.b32.xlu0 %v904, 256
        %v907 = vpop.permute.xlu0 %906
        %v908 = vld [vmem:[#allocation10] sm:$0x1]
        %v910 = vlaneseq
        %v911 = vshrl.u32 %v910, 7
        %v912 = vsub.s32 0, %v911
        %v913 = vrot.slane %v908, %v912
        %v915 = vmul.f32 %v858, %v913
        %v916 = vmul.f32 %v865, %v913
        %v917 = vmul.f32 %v872, %v913
        %v918 = vmul.f32 %v879, %v913
        %v919 = vmul.f32 %v886, %v913
        %v920 = vmul.f32 %v893, %v913
        %v921 = vmul.f32 %v900, %v913
        %v922 = vmul.f32 %v907, %v913
        %v924 = vcombine.high %v701, %v701
        %v926 = vunpack.c.l.s4 1966171168
        %v927 = vunpack.c.0.s8 %v926
        %v928 = vlaneseq
        %v929 = vshrl.u32 %v928, 7
        %v930 = vsub.s32 %v927, %v929
        %v931 = vrot.slane %v701, %v930
        %v933 = vunpack.c.l.s4 1966171168
        %v934 = vunpack.c.0.s8 %v933
        %v935 = vlaneseq
        %v936 = vshrl.u32 %v935, 7
        %v937 = vsub.s32 %v934, %v936
        %v938 = vrot.slane %v924, %v937
        %v939 = vcombine.high %v931, %v931
        %v940 = vcombine.high %v938, %v938
        %v942 = vunpack.c.l.s4 1966171168
        %v943 = vunpack.c.0.s8 %v942
        %v944 = vlaneseq
        %v945 = vshrl.u32 %v944, 7
        %v946 = vsub.s32 %v943, %v945
        %v947 = vrot.slane %v931, %v946
        %v949 = vunpack.c.l.s4 1966171168
        %v950 = vunpack.c.0.s8 %v949
        %v951 = vlaneseq
        %v952 = vshrl.u32 %v951, 7
        %v953 = vsub.s32 %v950, %v952
        %v954 = vrot.slane %v938, %v953
        %v956 = vunpack.c.l.s4 1966171168
        %v957 = vunpack.c.0.s8 %v956
        %v958 = vlaneseq
        %v959 = vshrl.u32 %v958, 7
        %v960 = vsub.s32 %v957, %v959
        %v961 = vrot.slane %v939, %v960
        %v963 = vunpack.c.l.s4 1966171168
        %v964 = vunpack.c.0.s8 %v963
        %v965 = vlaneseq
        %v966 = vshrl.u32 %v965, 7
        %v967 = vsub.s32 %v964, %v966
        %v968 = vrot.slane %v940, %v967
        %v969 = vcombine.high %v947, %v947
        %v970 = vcombine.high %v954, %v954
        %v971 = vcombine.high %v961, %v961
        %v972 = vcombine.high %v968, %v968
        %v973 = vlaneseq
        %v974 = vshrl.u32 %v973, 7
        %v975 = vsub.s32 0, %v974
        %v976 = vrot.slane %v947, %v975
        %v977 = vlaneseq
        %v978 = vshrl.u32 %v977, 7
        %v979 = vsub.s32 0, %v978
        %v980 = vrot.slane %v961, %v979
        %v981 = vlaneseq
        %v982 = vshrl.u32 %v981, 7
        %v983 = vsub.s32 0, %v982
        %v984 = vrot.slane %v969, %v983
        %v985 = vlaneseq
        %v986 = vshrl.u32 %v985, 7
        %v987 = vsub.s32 0, %v986
        %v988 = vrot.slane %v971, %v987
        %v989 = vlaneseq
        %v990 = vshrl.u32 %v989, 7
        %v991 = vsub.s32 0, %v990
        %v992 = vrot.slane %v954, %v991
        %v993 = vlaneseq
        %v994 = vshrl.u32 %v993, 7
        %v995 = vsub.s32 0, %v994
        %v996 = vrot.slane %v968, %v995
        %v997 = vlaneseq
        %v998 = vshrl.u32 %v997, 7
        %v999 = vsub.s32 0, %v998
        %v1000 = vrot.slane %v970, %v999
        %v1001 = vlaneseq
        %v1002 = vshrl.u32 %v1001, 7
        %v1003 = vsub.s32 0, %v1002
        %v1004 = vrot.slane %v972, %v1003
        %v1013 = vadd.f32 %v976, %v844
        %v1014 = vadd.f32 %v980, %v845
        %v1015 = vadd.f32 %v984, %v846
        %v1016 = vadd.f32 %v988, %v847
        %v1017 = vadd.f32 %v992, %v848
        %v1018 = vadd.f32 %v996, %v849
        %v1019 = vadd.f32 %v1000, %v850
        %v1020 = vadd.f32 %v1004, %v851
        %v1021 = vadd.f32 %v1013, %v915
        %v1022 = vadd.f32 %v1014, %v916
        %v1023 = vadd.f32 %v1015, %v917
        %v1024 = vadd.f32 %v1016, %v918
        %v1025 = vadd.f32 %v1017, %v919
        %v1026 = vadd.f32 %v1018, %v920
        %v1027 = vadd.f32 %v1019, %v921
        %v1028 = vadd.f32 %v1020, %v922
        %v1029 = vtanh.pop %v1021
        %v1030 = vtanh.pop %v1022
        %v1031 = vtanh.pop %v1023
        %v1032 = vtanh.pop %v1024
        %v1033 = vtanh.pop %v1025
        %v1034 = vtanh.pop %v1026
        %v1035 = vtanh.pop %v1027
        %v1036 = vtanh.pop %v1028
        %v1037 = vld [vmem:[#allocation11] sm:$0x1]
        %v1039 = vlaneseq
        %v1040 = vshrl.u32 %v1039, 7
        %v1041 = vsub.s32 0, %v1040
        %v1042 = vrot.slane %v1037, %v1041
        %v1044 = vmul.f32 %v1029, %v1042
        %v1045 = vmul.f32 %v1030, %v1042
        %v1046 = vmul.f32 %v1031, %v1042
        %v1047 = vmul.f32 %v1032, %v1042
        %v1048 = vmul.f32 %v1033, %v1042
        %v1049 = vmul.f32 %v1034, %v1042
        %v1050 = vmul.f32 %v1035, %v1042
        %v1051 = vmul.f32 %v1036, %v1042
        %v1052 = vsel %vm630, %v1044, 0.0
        %1053 = vadd.xlane.f32.xlu0 %v1052
        %v1054 = vpop.xlane.xlu0 %1053
        %v1055 = vsel %vm630, %v1045, 0.0
        %1056 = vadd.xlane.f32.xlu0 %v1055
        %v1057 = vpop.xlane.xlu0 %1056
        %v1058 = vsel %vm630, %v1046, 0.0
        %1059 = vadd.xlane.f32.xlu0 %v1058
        %v1060 = vpop.xlane.xlu0 %1059
        %v1061 = vsel %vm630, %v1047, 0.0
        %1062 = vadd.xlane.f32.xlu0 %v1061
        %v1063 = vpop.xlane.xlu0 %1062
        %v1064 = vsel %vm630, %v1048, 0.0
        %1065 = vadd.xlane.f32.xlu0 %v1064
        %v1066 = vpop.xlane.xlu0 %1065
        %v1067 = vsel %vm630, %v1049, 0.0
        %1068 = vadd.xlane.f32.xlu0 %v1067
        %v1069 = vpop.xlane.xlu0 %1068
        %v1070 = vsel %vm630, %v1050, 0.0
        %1071 = vadd.xlane.f32.xlu0 %v1070
        %v1072 = vpop.xlane.xlu0 %1071
        %v1073 = vsel %vm630, %v1051, 0.0
        %1074 = vadd.xlane.f32.xlu0 %v1073
        %v1075 = vpop.xlane.xlu0 %1074
        %v1077 = vlaneseq
        %v1078 = vshrl.u32 %v1077, 7
        %v1079 = vsub.s32 0, %v1078
        %v1080 = vrot.slane %v625, %v1079
        %1082 = vbcast.lane.b32.xlu0 %v1080, 256
        %v1083 = vpop.permute.xlu0 %1082
        %v1084 = vlaneseq
        %v1085 = vshrl.u32 %v1084, 7
        %v1086 = vsub.s32 1, %v1085
        %v1087 = vrot.slane %v625, %v1086
        %1089 = vbcast.lane.b32.xlu0 %v1087, 256
        %v1090 = vpop.permute.xlu0 %1089
        %v1091 = vlaneseq
        %v1092 = vshrl.u32 %v1091, 7
        %v1093 = vsub.s32 2, %v1092
        %v1094 = vrot.slane %v625, %v1093
        %1096 = vbcast.lane.b32.xlu0 %v1094, 256
        %v1097 = vpop.permute.xlu0 %1096
        %v1098 = vlaneseq
        %v1099 = vshrl.u32 %v1098, 7
        %v1100 = vsub.s32 3, %v1099
        %v1101 = vrot.slane %v625, %v1100
        %1103 = vbcast.lane.b32.xlu0 %v1101, 256
        %v1104 = vpop.permute.xlu0 %1103
        %v1105 = vlaneseq
        %v1106 = vshrl.u32 %v1105, 7
        %v1107 = vsub.s32 4, %v1106
        %v1108 = vrot.slane %v625, %v1107
        %1110 = vbcast.lane.b32.xlu0 %v1108, 256
        %v1111 = vpop.permute.xlu0 %1110
        %v1112 = vlaneseq
        %v1113 = vshrl.u32 %v1112, 7
        %v1114 = vsub.s32 5, %v1113
        %v1115 = vrot.slane %v625, %v1114
        %1117 = vbcast.lane.b32.xlu0 %v1115, 256
        %v1118 = vpop.permute.xlu0 %1117
        %v1119 = vlaneseq
        %v1120 = vshrl.u32 %v1119, 7
        %v1121 = vsub.s32 6, %v1120
        %v1122 = vrot.slane %v625, %v1121
        %1124 = vbcast.lane.b32.xlu0 %v1122, 256
        %v1125 = vpop.permute.xlu0 %1124
        %v1126 = vlaneseq
        %v1127 = vshrl.u32 %v1126, 7
        %v1128 = vsub.s32 7, %v1127
        %v1129 = vrot.slane %v625, %v1128
        %1131 = vbcast.lane.b32.xlu0 %v1129, 256
        %v1132 = vpop.permute.xlu0 %1131
        %v1141 = vadd.f32 %v1054, %v1083
        %v1142 = vadd.f32 %v1057, %v1090
        %v1143 = vadd.f32 %v1060, %v1097
        %v1144 = vadd.f32 %v1063, %v1104
        %v1145 = vadd.f32 %v1066, %v1111
        %v1146 = vadd.f32 %v1069, %v1118
        %v1147 = vadd.f32 %v1072, %v1125
        %v1148 = vadd.f32 %v1075, %v1132
        %1157 = vset.pattern.permute.xlu0 0
        %1158 = vperm.xlu0 %1157, %v1141
        %v1159 = vpop.permute.xlu0 %1158
        %1160 = vset.pattern.permute.xlu0 0
        %1161 = vperm.xlu0 %1160, %v1142
        %v1162 = vpop.permute.xlu0 %1161
        %1163 = vset.pattern.permute.xlu0 0
        %1164 = vperm.xlu0 %1163, %v1143
        %v1165 = vpop.permute.xlu0 %1164
        %1166 = vset.pattern.permute.xlu0 0
        %1167 = vperm.xlu0 %1166, %v1144
        %v1168 = vpop.permute.xlu0 %1167
        %1169 = vset.pattern.permute.xlu0 0
        %1170 = vperm.xlu0 %1169, %v1145
        %v1171 = vpop.permute.xlu0 %1170
        %1172 = vset.pattern.permute.xlu0 0
        %1173 = vperm.xlu0 %1172, %v1146
        %v1174 = vpop.permute.xlu0 %1173
        %1175 = vset.pattern.permute.xlu0 0
        %1176 = vperm.xlu0 %1175, %v1147
        %v1177 = vpop.permute.xlu0 %1176
        %1178 = vset.pattern.permute.xlu0 0
        %1179 = vperm.xlu0 %1178, %v1148
        %v1180 = vpop.permute.xlu0 %1179
        %v1181 = vlaneseq
        %v1182 = vand.u32 %v1181, 127
        %v1183 = vlaneseq
        %v1184 = vshrl.u32 %v1183, 7
        %v1185 = vsub.s32 %v1182, %v1184
        %v1186 = vrot.slane %v1159, %v1185
        %v1187 = vlaneseq
        %v1188 = vshrl.u32 %v1187, 7
        %v1189 = vsub.s32 %v1182, %v1188
        %v1190 = vrot.slane %v1162, %v1189
        %v1191 = vlaneseq
        %v1192 = vshrl.u32 %v1191, 7
        %v1193 = vsub.s32 %v1182, %v1192
        %v1194 = vrot.slane %v1165, %v1193
        %v1195 = vlaneseq
        %v1196 = vshrl.u32 %v1195, 7
        %v1197 = vsub.s32 %v1182, %v1196
        %v1198 = vrot.slane %v1168, %v1197
        %v1199 = vlaneseq
        %v1200 = vshrl.u32 %v1199, 7
        %v1201 = vsub.s32 %v1182, %v1200
        %v1202 = vrot.slane %v1171, %v1201
        %v1203 = vlaneseq
        %v1204 = vshrl.u32 %v1203, 7
        %v1205 = vsub.s32 %v1182, %v1204
        %v1206 = vrot.slane %v1174, %v1205
        %v1207 = vlaneseq
        %v1208 = vshrl.u32 %v1207, 7
        %v1209 = vsub.s32 %v1182, %v1208
        %v1210 = vrot.slane %v1177, %v1209
        %v1211 = vlaneseq
        %v1212 = vshrl.u32 %v1211, 7
        %v1213 = vsub.s32 %v1182, %v1212
        %v1214 = vrot.slane %v1180, %v1213
        %vm1215 = vcmask 1041409
        %v1216 = vsel %vm1215, %v1190, %v1186
        %vm1217 = vcmask 1042434
        %v1218 = vsel %vm1217, %v1194, %v1216
        %vm1219 = vcmask 1043459
        %v1220 = vsel %vm1219, %v1198, %v1218
        %vm1221 = vcmask 1044484
        %v1222 = vsel %vm1221, %v1202, %v1220
        %vm1223 = vcmask 1045509
        %v1224 = vsel %vm1223, %v1206, %v1222
        %vm1225 = vcmask 1046534
        %v1226 = vsel %vm1225, %v1210, %v1224
        %vm1227 = vcmask 1047559
        %v1228 = vsel %vm1227, %v1214, %v1226
        %vm1230 = vcmask 64512
        %v1231 = vsel %vm1230, %v1228, -inf
        %1232 = vmax.xlane.f32.xlu0 %v1231
        %v1233 = vpop.xlane.xlu0 %1232
        %v1235 = vlaneseq
        %v1236 = vshrl.u32 %v1235, 7
        %v1237 = vsub.s32 0, %v1236
        %v1238 = vrot.slane %v1233, %v1237
        %v1239 = vlaneseq
        %v1240 = vshrl.u32 %v1239, 7
        %v1241 = vsub.s32 1, %v1240
        %v1242 = vrot.slane %v1233, %v1241
        %v1243 = vlaneseq
        %v1244 = vshrl.u32 %v1243, 7
        %v1245 = vsub.s32 2, %v1244
        %v1246 = vrot.slane %v1233, %v1245
        %v1247 = vlaneseq
        %v1248 = vshrl.u32 %v1247, 7
        %v1249 = vsub.s32 3, %v1248
        %v1250 = vrot.slane %v1233, %v1249
        %v1251 = vlaneseq
        %v1252 = vshrl.u32 %v1251, 7
        %v1253 = vsub.s32 4, %v1252
        %v1254 = vrot.slane %v1233, %v1253
        %v1255 = vlaneseq
        %v1256 = vshrl.u32 %v1255, 7
        %v1257 = vsub.s32 5, %v1256
        %v1258 = vrot.slane %v1233, %v1257
        %v1259 = vlaneseq
        %v1260 = vshrl.u32 %v1259, 7
        %v1261 = vsub.s32 6, %v1260
        %v1262 = vrot.slane %v1233, %v1261
        %v1263 = vlaneseq
        %v1264 = vshrl.u32 %v1263, 7
        %v1265 = vsub.s32 7, %v1264
        %v1266 = vrot.slane %v1233, %v1265
        %v1275 = vsub.f32 %v1141, %v1238
        %v1276 = vsub.f32 %v1142, %v1242
        %v1277 = vsub.f32 %v1143, %v1246
        %v1278 = vsub.f32 %v1144, %v1250
        %v1279 = vsub.f32 %v1145, %v1254
        %v1280 = vsub.f32 %v1146, %v1258
        %v1281 = vsub.f32 %v1147, %v1262
        %v1282 = vsub.f32 %v1148, %v1266
        %v1283 = vmul.f32 %v1275, 1.442695
        %v1284 = vpow.pop %v1283
        %v1285 = vmul.f32 %v1276, 1.442695
        %v1286 = vpow.pop %v1285
        %v1287 = vmul.f32 %v1277, 1.442695
        %v1288 = vpow.pop %v1287
        %v1289 = vmul.f32 %v1278, 1.442695
        %v1290 = vpow.pop %v1289
        %v1291 = vmul.f32 %v1279, 1.442695
        %v1292 = vpow.pop %v1291
        %v1293 = vmul.f32 %v1280, 1.442695
        %v1294 = vpow.pop %v1293
        %v1295 = vmul.f32 %v1281, 1.442695
        %v1296 = vpow.pop %v1295
        %v1297 = vmul.f32 %v1282, 1.442695
        %v1298 = vpow.pop %v1297
        %1307 = vset.pattern.permute.xlu0 0
        %1308 = vperm.xlu0 %1307, %v1284
        %v1309 = vpop.permute.xlu0 %1308
        %1310 = vset.pattern.permute.xlu0 0
        %1311 = vperm.xlu0 %1310, %v1286
        %v1312 = vpop.permute.xlu0 %1311
        %1313 = vset.pattern.permute.xlu0 0
        %1314 = vperm.xlu0 %1313, %v1288
        %v1315 = vpop.permute.xlu0 %1314
        %1316 = vset.pattern.permute.xlu0 0
        %1317 = vperm.xlu0 %1316, %v1290
        %v1318 = vpop.permute.xlu0 %1317
        %1319 = vset.pattern.permute.xlu0 0
        %1320 = vperm.xlu0 %1319, %v1292
        %v1321 = vpop.permute.xlu0 %1320
        %1322 = vset.pattern.permute.xlu0 0
        %1323 = vperm.xlu0 %1322, %v1294
        %v1324 = vpop.permute.xlu0 %1323
        %1325 = vset.pattern.permute.xlu0 0
        %1326 = vperm.xlu0 %1325, %v1296
        %v1327 = vpop.permute.xlu0 %1326
        %1328 = vset.pattern.permute.xlu0 0
        %1329 = vperm.xlu0 %1328, %v1298
        %v1330 = vpop.permute.xlu0 %1329
        %v1331 = vlaneseq
        %v1332 = vshrl.u32 %v1331, 7
        %v1333 = vsub.s32 %v1182, %v1332
        %v1334 = vrot.slane %v1309, %v1333
        %v1335 = vlaneseq
        %v1336 = vshrl.u32 %v1335, 7
        %v1337 = vsub.s32 %v1182, %v1336
        %v1338 = vrot.slane %v1312, %v1337
        %v1339 = vlaneseq
        %v1340 = vshrl.u32 %v1339, 7
        %v1341 = vsub.s32 %v1182, %v1340
        %v1342 = vrot.slane %v1315, %v1341
        %v1343 = vlaneseq
        %v1344 = vshrl.u32 %v1343, 7
        %v1345 = vsub.s32 %v1182, %v1344
        %v1346 = vrot.slane %v1318, %v1345
        %v1347 = vlaneseq
        %v1348 = vshrl.u32 %v1347, 7
        %v1349 = vsub.s32 %v1182, %v1348
        %v1350 = vrot.slane %v1321, %v1349
        %v1351 = vlaneseq
        %v1352 = vshrl.u32 %v1351, 7
        %v1353 = vsub.s32 %v1182, %v1352
        %v1354 = vrot.slane %v1324, %v1353
        %v1355 = vlaneseq
        %v1356 = vshrl.u32 %v1355, 7
        %v1357 = vsub.s32 %v1182, %v1356
        %v1358 = vrot.slane %v1327, %v1357
        %v1359 = vlaneseq
        %v1360 = vshrl.u32 %v1359, 7
        %v1361 = vsub.s32 %v1182, %v1360
        %v1362 = vrot.slane %v1330, %v1361
        %v1363 = vsel %vm1215, %v1338, %v1334
        %v1364 = vsel %vm1217, %v1342, %v1363
        %v1365 = vsel %vm1219, %v1346, %v1364
        %v1366 = vsel %vm1221, %v1350, %v1365
        %v1367 = vsel %vm1223, %v1354, %v1366
        %v1368 = vsel %vm1225, %v1358, %v1367
        %v1369 = vsel %vm1227, %v1362, %v1368
        %v1371 = vsel %vm1230, %v1369, 0.0
        %1372 = vadd.xlane.f32.xlu0 %v1371
        %v1373 = vpop.xlane.xlu0 %1372
        %v1374 = vrcp.pop %v1373
        %v1376 = vlaneseq
        %v1377 = vshrl.u32 %v1376, 7
        %v1378 = vsub.s32 0, %v1377
        %v1379 = vrot.slane %v1374, %v1378
        %v1380 = vlaneseq
        %v1381 = vshrl.u32 %v1380, 7
        %v1382 = vsub.s32 1, %v1381
        %v1383 = vrot.slane %v1374, %v1382
        %v1384 = vlaneseq
        %v1385 = vshrl.u32 %v1384, 7
        %v1386 = vsub.s32 2, %v1385
        %v1387 = vrot.slane %v1374, %v1386
        %v1388 = vlaneseq
        %v1389 = vshrl.u32 %v1388, 7
        %v1390 = vsub.s32 3, %v1389
        %v1391 = vrot.slane %v1374, %v1390
        %v1392 = vlaneseq
        %v1393 = vshrl.u32 %v1392, 7
        %v1394 = vsub.s32 4, %v1393
        %v1395 = vrot.slane %v1374, %v1394
        %v1396 = vlaneseq
        %v1397 = vshrl.u32 %v1396, 7
        %v1398 = vsub.s32 5, %v1397
        %v1399 = vrot.slane %v1374, %v1398
        %v1400 = vlaneseq
        %v1401 = vshrl.u32 %v1400, 7
        %v1402 = vsub.s32 6, %v1401
        %v1403 = vrot.slane %v1374, %v1402
        %v1404 = vlaneseq
        %v1405 = vshrl.u32 %v1404, 7
        %v1406 = vsub.s32 7, %v1405
        %v1407 = vrot.slane %v1374, %v1406
        %v1416 = vmul.f32 %v1284, %v1379
        %v1417 = vmul.f32 %v1286, %v1383
        %v1418 = vmul.f32 %v1288, %v1387
        %v1419 = vmul.f32 %v1290, %v1391
        %v1420 = vmul.f32 %v1292, %v1395
        %v1421 = vmul.f32 %v1294, %v1399
        %v1422 = vmul.f32 %v1296, %v1403
        %v1423 = vmul.f32 %v1298, %v1407
        %v1432 = vmul.f32 %v1309, %v616
        %v1433 = vmul.f32 %v1312, %v617
        %v1434 = vmul.f32 %v1315, %v618
        %v1435 = vmul.f32 %v1318, %v619
        %v1436 = vmul.f32 %v1321, %v620
        %v1437 = vmul.f32 %v1324, %v621
        %v1438 = vmul.f32 %v1327, %v622
        %v1439 = vmul.f32 %v1330, %v623
        %v1440 = vsel %vm630, %v1432, 0.0
        %v1441 = vrot.slane %v1440, 4
        %v1442 = vadd.f32 %v1440, %v1441
        %v1443 = vrot.slane %v1442, 2
        %v1444 = vadd.f32 %v1442, %v1443
        %v1445 = vrot.slane %v1444, 1
        %v1446 = vadd.f32 %v1444, %v1445
        %v1447 = vsel %vm630, %v1433, 0.0
        %v1448 = vrot.slane %v1447, 4
        %v1449 = vadd.f32 %v1447, %v1448
        %v1450 = vrot.slane %v1449, 2
        %v1451 = vadd.f32 %v1449, %v1450
        %v1452 = vrot.slane %v1451, 1
        %v1453 = vadd.f32 %v1451, %v1452
        %v1454 = vsel %vm630, %v1434, 0.0
        %v1455 = vrot.slane %v1454, 4
        %v1456 = vadd.f32 %v1454, %v1455
        %v1457 = vrot.slane %v1456, 2
        %v1458 = vadd.f32 %v1456, %v1457
        %v1459 = vrot.slane %v1458, 1
        %v1460 = vadd.f32 %v1458, %v1459
        %v1461 = vsel %vm630, %v1435, 0.0
        %v1462 = vrot.slane %v1461, 4
        %v1463 = vadd.f32 %v1461, %v1462
        %v1464 = vrot.slane %v1463, 2
        %v1465 = vadd.f32 %v1463, %v1464
        %v1466 = vrot.slane %v1465, 1
        %v1467 = vadd.f32 %v1465, %v1466
        %v1468 = vsel %vm630, %v1436, 0.0
        %v1469 = vrot.slane %v1468, 4
        %v1470 = vadd.f32 %v1468, %v1469
        %v1471 = vrot.slane %v1470, 2
        %v1472 = vadd.f32 %v1470, %v1471
        %v1473 = vrot.slane %v1472, 1
        %v1474 = vadd.f32 %v1472, %v1473
        %v1475 = vsel %vm630, %v1437, 0.0
        %v1476 = vrot.slane %v1475, 4
        %v1477 = vadd.f32 %v1475, %v1476
        %v1478 = vrot.slane %v1477, 2
        %v1479 = vadd.f32 %v1477, %v1478
        %v1480 = vrot.slane %v1479, 1
        %v1481 = vadd.f32 %v1479, %v1480
        %v1482 = vsel %vm630, %v1438, 0.0
        %v1483 = vrot.slane %v1482, 4
        %v1484 = vadd.f32 %v1482, %v1483
        %v1485 = vrot.slane %v1484, 2
        %v1486 = vadd.f32 %v1484, %v1485
        %v1487 = vrot.slane %v1486, 1
        %v1488 = vadd.f32 %v1486, %v1487
        %v1489 = vsel %vm630, %v1439, 0.0
        %v1490 = vrot.slane %v1489, 4
        %v1491 = vadd.f32 %v1489, %v1490
        %v1492 = vrot.slane %v1491, 2
        %v1493 = vadd.f32 %v1491, %v1492
        %v1494 = vrot.slane %v1493, 1
        %v1495 = vadd.f32 %v1493, %v1494
        %v1496 = vrot.slane %v1374, 1
        %v1497 = vrot.slane %v1374, 2
        %v1498 = vrot.slane %v1374, 3
        %v1499 = vrot.slane %v1374, 4
        %v1500 = vrot.slane %v1374, 5
        %v1501 = vrot.slane %v1374, 6
        %v1502 = vrot.slane %v1374, 7
        %v1511 = vmul.f32 %v1446, %v1374
        %v1512 = vmul.f32 %v1453, %v1496
        %v1513 = vmul.f32 %v1460, %v1497
        %v1514 = vmul.f32 %v1467, %v1498
        %v1515 = vmul.f32 %v1474, %v1499
        %v1516 = vmul.f32 %v1481, %v1500
        %v1517 = vmul.f32 %v1488, %v1501
        %v1518 = vmul.f32 %v1495, %v1502
        %v1519 = vld [vmem:[%s9] sm:$0xff]
        %v1520 = vld [vmem:[%s9 + $0x8] sm:$0xff]
        %v1521 = vld [vmem:[%s9 + $0x10] sm:$0xff]
        %v1522 = vld [vmem:[%s9 + $0x18] sm:$0xff]
        %v1523 = vld [vmem:[#allocation13] sm:$0xff]
        %v1524 = vld [vmem:[#allocation13 + $0x8] sm:$0xff]
        %v1525 = vld [vmem:[#allocation13 + $0x10] sm:$0xff]
        %v1526 = vld [vmem:[#allocation13 + $0x18] sm:$0xff]
        %1527 = vmatprep.subr.mxu0 0.0
        %1528 = vmatpush1.msra.mxu0 0.0
        %1529 = vmatprep.subr.mxu0 0.0
        %1530 = vmatpush1.msra.mxu0 0.0
        %1531 = vmatprep.subr.mxu0 0.0
        %1532 = vmatpush1.msra.mxu0 0.0
        %1533 = vmatprep.subr.mxu0 0.0
        %1534 = vmatpush1.msra.mxu0 0.0
        %1535 = vmatprep.subr.mxu0 0.0
        %1536 = vmatpush1.msra.mxu0 0.0
        %1537 = vmatprep.subr.mxu0 0.0
        %1538 = vmatpush1.msra.mxu0 0.0
        %1539 = vmatprep.subr.mxu0 0.0
        %1540 = vmatpush1.msra.mxu0 0.0
        %1541 = vmatprep.subr.mxu0 0.0
        %1542 = vmatpush1.msra.mxu0 0.0
        %1543 = vmatprep.subr.mxu0 0.0
        %1544 = vmatpush1.msra.mxu0 0.0
        %1545 = vmatprep.subr.mxu0 0.0
        %1546 = vmatpush1.msra.mxu0 0.0
        %1547 = vmatprep.subr.mxu0 0.0
        %1548 = vmatpush1.msra.mxu0 0.0
        %1549 = vmatprep.subr.mxu0 0.0
        %1550 = vmatpush1.msra.mxu0 0.0
        %1551 = vmatprep.subr.mxu0 0.0
        %1552 = vmatpush1.msra.mxu0 %v1526
        %1553 = vmatprep.subr.mxu0 0.0
        %1554 = vmatpush1.msra.mxu0 %v1525
        %1555 = vmatprep.subr.mxu0 0.0
        %1556 = vmatpush1.msra.mxu0 %v1524
        %1557 = vmatprep.subr.mxu0 0.0
        %1558 = vmatpush1.msra.mxu0 %v1523
        %1559 = vmatprep.subr.mxu0 0.0
        %1560 = vmatpush2.msra.mxu0 0.0
        %1561 = vmatprep.subr.mxu0 0.0
        %1562 = vmatpush2.msra.mxu0 0.0
        %1563 = vmatprep.subr.mxu0 0.0
        %1564 = vmatpush2.msra.mxu0 0.0
        %1565 = vmatprep.subr.mxu0 0.0
        %1566 = vmatpush2.msra.mxu0 0.0
        %1567 = vmatprep.subr.mxu0 0.0
        %1568 = vmatpush2.msra.mxu0 0.0
        %1569 = vmatprep.subr.mxu0 0.0
        %1570 = vmatpush2.msra.mxu0 0.0
        %1571 = vmatprep.subr.mxu0 0.0
        %1572 = vmatpush2.msra.mxu0 0.0
        %1573 = vmatprep.subr.mxu0 0.0
        %1574 = vmatpush2.msra.mxu0 0.0
        %1575 = vmatprep.subr.mxu0 0.0
        %1576 = vmatpush2.msra.mxu0 0.0
        %1577 = vmatprep.subr.mxu0 0.0
        %1578 = vmatpush2.msra.mxu0 0.0
        %1579 = vmatprep.subr.mxu0 0.0
        %1580 = vmatpush2.msra.mxu0 0.0
        %1581 = vmatprep.subr.mxu0 0.0
        %1582 = vmatpush2.msra.mxu0 0.0
        %1583 = vmatprep.subr.mxu0 0.0
        %1584 = vmatpush2.msra.mxu0 0.0
        %1585 = vmatprep.subr.mxu0 0.0
        %1586 = vmatpush2.msra.mxu0 0.0
        %1587 = vmatprep.subr.mxu0 0.0
        %1588 = vmatpush2.msra.mxu0 0.0
        %1589 = vmatprep.subr.mxu0 0.0
        %1590 = vmatpush2.msra.mxu0 0.0
        %1591 = vmatprep.mubr.f32.mxu0 0.0
        %1592 = vmatmul.mubr.f32.gmra.mxu0 %v632
        %v1593 = vpop.f32.mrf.mxu0
        %v1594 = vadd.f32 0.0, %v1593
        %v1595 = vpop.f32.mrf.mxu0
        %1596 = vdwg.mxu0
        %v1605 = vrot.slane %v1512, 7
        %v1606 = vsel %vm1215, %v1605, %v1511
        %v1607 = vrot.slane %v1513, 6
        %v1608 = vsel %vm1217, %v1607, %v1606
        %v1609 = vrot.slane %v1514, 5
        %v1610 = vsel %vm1219, %v1609, %v1608
        %v1611 = vrot.slane %v1515, 4
        %v1612 = vsel %vm1221, %v1611, %v1610
        %v1613 = vrot.slane %v1516, 3
        %v1614 = vsel %vm1223, %v1613, %v1612
        %v1615 = vrot.slane %v1517, 2
        %v1616 = vsel %vm1225, %v1615, %v1614
        %v1617 = vrot.slane %v1518, 1
        %v1618 = vsel %vm1227, %v1617, %v1616
        %v1619 = vsel %vm630, %v1618, 0
        %1621 = vmatprep.subr.mxu0 0.0
        %1622 = vmatpush1.msra.mxu0 0.0
        %1623 = vmatprep.subr.mxu0 0.0
        %1624 = vmatpush1.msra.mxu0 0.0
        %1625 = vmatprep.subr.mxu0 0.0
        %1626 = vmatpush1.msra.mxu0 0.0
        %1627 = vmatprep.subr.mxu0 0.0
        %1628 = vmatpush1.msra.mxu0 0.0
        %1629 = vmatprep.subr.mxu0 0.0
        %1630 = vmatpush1.msra.mxu0 0.0
        %1631 = vmatprep.subr.mxu0 0.0
        %1632 = vmatpush1.msra.mxu0 0.0
        %1633 = vmatprep.subr.mxu0 0.0
        %1634 = vmatpush1.msra.mxu0 0.0
        %1635 = vmatprep.subr.mxu0 0.0
        %1636 = vmatpush1.msra.mxu0 0.0
        %1637 = vmatprep.subr.mxu0 0.0
        %1638 = vmatpush1.msra.mxu0 0.0
        %1639 = vmatprep.subr.mxu0 0.0
        %1640 = vmatpush1.msra.mxu0 0.0
        %1641 = vmatprep.subr.mxu0 0.0
        %1642 = vmatpush1.msra.mxu0 0.0
        %1643 = vmatprep.subr.mxu0 0.0
        %1644 = vmatpush1.msra.mxu0 0.0
        %1645 = vmatprep.subr.mxu0 0.0
        %1646 = vmatpush1.msra.mxu0 %v1522
        %1647 = vmatprep.subr.mxu0 0.0
        %1648 = vmatpush1.msra.mxu0 %v1521
        %1649 = vmatprep.subr.mxu0 0.0
        %1650 = vmatpush1.msra.mxu0 %v1520
        %1651 = vmatprep.subr.mxu0 0.0
        %1652 = vmatpush1.msra.mxu0 %v1519
        %1653 = vmatprep.subr.mxu0 0.0
        %1654 = vmatpush2.msra.mxu0 0.0
        %1655 = vmatprep.subr.mxu0 0.0
        %1656 = vmatpush2.msra.mxu0 0.0
        %1657 = vmatprep.subr.mxu0 0.0
        %1658 = vmatpush2.msra.mxu0 0.0
        %1659 = vmatprep.subr.mxu0 0.0
        %1660 = vmatpush2.msra.mxu0 0.0
        %1661 = vmatprep.subr.mxu0 0.0
        %1662 = vmatpush2.msra.mxu0 0.0
        %1663 = vmatprep.subr.mxu0 0.0
        %1664 = vmatpush2.msra.mxu0 0.0
        %1665 = vmatprep.subr.mxu0 0.0
        %1666 = vmatpush2.msra.mxu0 0.0
        %1667 = vmatprep.subr.mxu0 0.0
        %1668 = vmatpush2.msra.mxu0 0.0
        %1669 = vmatprep.subr.mxu0 0.0
        %1670 = vmatpush2.msra.mxu0 0.0
        %1671 = vmatprep.subr.mxu0 0.0
        %1672 = vmatpush2.msra.mxu0 0.0
        %1673 = vmatprep.subr.mxu0 0.0
        %1674 = vmatpush2.msra.mxu0 0.0
        %1675 = vmatprep.subr.mxu0 0.0
        %1676 = vmatpush2.msra.mxu0 0.0
        %1677 = vmatprep.subr.mxu0 0.0
        %1678 = vmatpush2.msra.mxu0 0.0
        %1679 = vmatprep.subr.mxu0 0.0
        %1680 = vmatpush2.msra.mxu0 0.0
        %1681 = vmatprep.subr.mxu0 0.0
        %1682 = vmatpush2.msra.mxu0 0.0
        %1683 = vmatprep.subr.mxu0 0.0
        %1684 = vmatpush2.msra.mxu0 0.0
        %1685 = vmatprep.mubr.f32.mxu0 0.0
        %1686 = vmatmul.mubr.f32.gmra.mxu0 %v1619
        %v1687 = vpop.f32.mrf.mxu0
        %v1688 = vadd.f32 %v1594, %v1687
        %v1689 = vpop.f32.mrf.mxu0
        %1690 = vdwg.mxu0
        %v1691 = vtanh.pop %v1688
        %1692 = vst.msk [vmem:[%s591] sm:$0xff] %vm630, %v1691
        %1694 = vst.msk [vmem:[%s598] sm:$0xff] %vm630, %v1618
        %1703 = vset.pattern.permute.xlu0 0
        %1704 = vperm.xlu0 %1703, %v1416
        %v1705 = vpop.permute.xlu0 %1704
        %1706 = vset.pattern.permute.xlu0 0
        %1707 = vperm.xlu0 %1706, %v1417
        %v1708 = vpop.permute.xlu0 %1707
        %1709 = vset.pattern.permute.xlu0 0
        %1710 = vperm.xlu0 %1709, %v1418
        %v1711 = vpop.permute.xlu0 %1710
        %1712 = vset.pattern.permute.xlu0 0
        %1713 = vperm.xlu0 %1712, %v1419
        %v1714 = vpop.permute.xlu0 %1713
        %1715 = vset.pattern.permute.xlu0 0
        %1716 = vperm.xlu0 %1715, %v1420
        %v1717 = vpop.permute.xlu0 %1716
        %1718 = vset.pattern.permute.xlu0 0
        %1719 = vperm.xlu0 %1718, %v1421
        %v1720 = vpop.permute.xlu0 %1719
        %1721 = vset.pattern.permute.xlu0 0
        %1722 = vperm.xlu0 %1721, %v1422
        %v1723 = vpop.permute.xlu0 %1722
        %1724 = vset.pattern.permute.xlu0 0
        %1725 = vperm.xlu0 %1724, %v1423
        %v1726 = vpop.permute.xlu0 %1725
        %v1727 = vlaneseq
        %v1728 = vshrl.u32 %v1727, 7
        %v1729 = vsub.s32 %v1182, %v1728
        %v1730 = vrot.slane %v1705, %v1729
        %v1731 = vlaneseq
        %v1732 = vshrl.u32 %v1731, 7
        %v1733 = vsub.s32 %v1182, %v1732
        %v1734 = vrot.slane %v1708, %v1733
        %v1735 = vlaneseq
        %v1736 = vshrl.u32 %v1735, 7
        %v1737 = vsub.s32 %v1182, %v1736
        %v1738 = vrot.slane %v1711, %v1737
        %v1739 = vlaneseq
        %v1740 = vshrl.u32 %v1739, 7
        %v1741 = vsub.s32 %v1182, %v1740
        %v1742 = vrot.slane %v1714, %v1741
        %v1743 = vlaneseq
        %v1744 = vshrl.u32 %v1743, 7
        %v1745 = vsub.s32 %v1182, %v1744
        %v1746 = vrot.slane %v1717, %v1745
        %v1747 = vlaneseq
        %v1748 = vshrl.u32 %v1747, 7
        %v1749 = vsub.s32 %v1182, %v1748
        %v1750 = vrot.slane %v1720, %v1749
        %v1751 = vlaneseq
        %v1752 = vshrl.u32 %v1751, 7
        %v1753 = vsub.s32 %v1182, %v1752
        %v1754 = vrot.slane %v1723, %v1753
        %v1755 = vlaneseq
        %v1756 = vshrl.u32 %v1755, 7
        %v1757 = vsub.s32 %v1182, %v1756
        %v1758 = vrot.slane %v1726, %v1757
        %v1759 = vsel %vm1215, %v1734, %v1730
        %v1760 = vsel %vm1217, %v1738, %v1759
        %v1761 = vsel %vm1219, %v1742, %v1760
        %v1762 = vsel %vm1221, %v1746, %v1761
        %v1763 = vsel %vm1223, %v1750, %v1762
        %v1764 = vsel %vm1225, %v1754, %v1763
        %v1765 = vsel %vm1227, %v1758, %v1764
        %v1767 = vsel %vm1230, %v1765, 0.0
        %1768 = vst [vmem:[%s605] sm:$0xff] %v1767
        %s1769 = sand.u32 %s298, 1
        %s1770 = scalar_lea.sflag [#allocation4], %s1769
        %s1771 = sand.u32 %s298, 1
        %s1772 = smul.addr %s1771, 8
        %s1773 = scalar_lea.vmem [#allocation14], %s1772
        %s1774 = sand.u32 %s39, 1
        %s1775 = scalar_lea.sflag [#allocation16], %s1774
        %s1776 = sand.u32 %s324, 1
        %s1777 = smul.addr %s1776, 8
        %s1778 = scalar_lea.vmem [#allocation15], %s1777
        %s1779 = sand.u32 %s39, 1
        %s1780 = scalar_lea.sflag [#allocation16], %s1779
        %s1781 = sand.u32 %s350, 1
        %s1782 = smul.addr %s1781, 8
        %s1783 = scalar_lea.vmem [#allocation17], %s1782
        // Predicated region
        $region93: #{tpu_custom_call.1} parent=63 // pred_check
          %p1784 = pneg %p308
        $region94: #{tpu_custom_call.1} parent=63 // pred_check_branch
          %1786 = sbr.rel (%p1784) target = $region96
        $region95: #{tpu_custom_call.1} parent=63 // pred_region
          %s1788 = ssub.s32 128, 128
          %1789 = vsyncadd %s1770, %s1788
          %s1790 = smul.addr %s39, 128
          %s1791 = scalar_lea.hbm %s11, %s1790
          %s1793 = sshll.u32 %s1773, 4
          %s1794 = int_to_ptr.vmem [resolvable:$true] %s1793
          %1796 = dma.vmem_to_hbm [thread:$0]  %s1794, 128, %s1791, %s1770
        $region96: #{tpu_custom_call.1} parent=63 // pred_fallthru
          _
        // Predicated region
        $region97: #{tpu_custom_call.1} parent=63 // pred_check
          %p1797 = pneg %p334
        $region98: #{tpu_custom_call.1} parent=63 // pred_check_branch
          %1799 = sbr.rel (%p1797) target = $region100
        $region99: #{tpu_custom_call.1} parent=63 // pred_region
          %s1801 = ssub.s32 128, 128
          %1802 = vsyncadd %s1775, %s1801
          %s1803 = smul.addr %s39, 128
          %s1804 = scalar_lea.hbm %s12, %s1803
          %s1806 = sshll.u32 %s1778, 4
          %s1807 = int_to_ptr.vmem [resolvable:$true] %s1806
          %1809 = dma.vmem_to_hbm [thread:$0]  %s1807, 128, %s1804, %s1775
        $region100: #{tpu_custom_call.1} parent=63 // pred_fallthru
          _
        // Predicated region
        $region101: #{tpu_custom_call.1} parent=63 // pred_check
          %p1810 = pneg %p360
        $region102: #{tpu_custom_call.1} parent=63 // pred_check_branch
          %1812 = sbr.rel (%p1810) target = $region104
        $region103: #{tpu_custom_call.1} parent=63 // pred_region
          %s1814 = ssub.s32 128, 128
          %1815 = vsyncadd %s1780, %s1814
          %s1816 = smul.addr %s39, 128
          %s1817 = scalar_lea.hbm %s13, %s1816
          %s1819 = sshll.u32 %s1783, 4
          %s1820 = int_to_ptr.vmem [resolvable:$true] %s1819
          %1822 = dma.vmem_to_hbm [thread:$0]  %s1820, 128, %s1817, %s1780
        $region104: #{tpu_custom_call.1} parent=63 // pred_fallthru
          _
      $region64: #{tpu_custom_call.1} parent=5 // pred_fallthru
        _
      %p1823 = scmp.le.s32.totalorder 2, %s34
      // Predicated region
      $region105: #{tpu_custom_call.1} parent=5 // pred_check
        %p1824 = pneg %p1823
      $region106: #{tpu_custom_call.1} parent=5 // pred_check_branch
        %1826 = sbr.rel (%p1824) target = $region108
      $region107: #{tpu_custom_call.1} parent=5 // pred_region
        %s1827 = ssub.s32 %s34, 2
        // Predicated region
        $region109: #{tpu_custom_call.1} parent=107 // pred_check
          %p1828 = pneg %p314
        $region110: #{tpu_custom_call.1} parent=107 // pred_check_branch
          %1830 = sbr.rel (%p1828) target = $region112
        $region111: #{tpu_custom_call.1} parent=107 // pred_region
          %s1831 = sand.u32 %s299, 1
          %s1832 = scalar_lea.sflag [#allocation4], %s1831
          %s1833 = sand.u32 %s299, 1
          %s1834 = smul.addr %s1833, 8
          %s1835 = scalar_lea.vmem [#allocation14], %s1834
          %1836 = dma.done %s1832, 128
        $region112: #{tpu_custom_call.1} parent=107 // pred_fallthru
          _
        // Predicated region
        $region113: #{tpu_custom_call.1} parent=107 // pred_check
          %p1837 = pneg %p340
        $region114: #{tpu_custom_call.1} parent=107 // pred_check_branch
          %1839 = sbr.rel (%p1837) target = $region116
        $region115: #{tpu_custom_call.1} parent=107 // pred_region
          %s1840 = sand.u32 %s40, 1
          %s1841 = scalar_lea.sflag [#allocation16], %s1840
          %s1842 = sand.u32 %s325, 1
          %s1843 = smul.addr %s1842, 8
          %s1844 = scalar_lea.vmem [#allocation15], %s1843
          %1845 = dma.done %s1841, 128
        $region116: #{tpu_custom_call.1} parent=107 // pred_fallthru
          _
        // Predicated region
        $region117: #{tpu_custom_call.1} parent=107 // pred_check
          %p1846 = pneg %p366
        $region118: #{tpu_custom_call.1} parent=107 // pred_check_branch
          %1848 = sbr.rel (%p1846) target = $region120
        $region119: #{tpu_custom_call.1} parent=107 // pred_region
          %s1849 = sand.u32 %s40, 1
          %s1850 = scalar_lea.sflag [#allocation16], %s1849
          %s1851 = sand.u32 %s351, 1
          %s1852 = smul.addr %s1851, 8
          %s1853 = scalar_lea.vmem [#allocation17], %s1852
          %1854 = dma.done %s1850, 128
        $region120: #{tpu_custom_call.1} parent=107 // pred_fallthru
          _
      $region108: #{tpu_custom_call.1} parent=5 // pred_fallthru
        _
    $region6: #{tpu_custom_call.1} parent=1 // loop_footer
      %s38 = sadd.s32 1, %s34
    $region7: #{tpu_custom_call.1} parent=1 // loop_footer_branch
      %33 = sbr.rel target = $region3
    $region8: #{tpu_custom_call.1} parent=1 // loop_exit
      _
    %1855 = vsyncpa [#allocation3], 1
    %s1856 = scalar_lea.sflag [#allocation3], 1
    %1857 = vsyncpa %s1856, 1
    %1858 = vsyncpa [#allocation6], 1
    %s1859 = scalar_lea.sflag [#allocation6], 1
    %1860 = vsyncpa %s1859, 1
    %1861 = vsyncpa [#allocation9], 1
    %1862 = vsyncpa [#allocation12], 1
    %1863 = vsyncpa [#allocation4], 1
    %s1864 = scalar_lea.sflag [#allocation4], 1
    %1865 = vsyncpa %s1864, 1
    %1866 = vsyncpa [#allocation16], 1
    %s1867 = scalar_lea.sflag [#allocation16], 1
    %1868 = vsyncpa %s1867, 1

</llo_original>
